<compile_context>
chip_gen: v7x
topology: tpu7x:2x2x1
jax: 0.10.0
libtpu: 0.0.40
codegen_flags: <defaults>
</compile_context>

<pallas_src>
import functools

import jax
import jax.numpy as jnp
from jax.experimental import pallas as pl
from jax.experimental.pallas import tpu as pltpu

_EPS = 1e-5  # PyTorch BatchNorm1d default eps.


def _bf16(a):
    return a.astype(jnp.bfloat16)


# --------------------------------------------------------------------------
# Phase 1 (grid over B, parallel): qkv projection, channel affinity, softmax,
# AV^T, and per-batch BN partial statistics (row sums + Gram matrix).
# --------------------------------------------------------------------------
def _affinity_kernel(x_ref, wqkv_ref, bqkv_ref, avt_ref, m_ref, g_ref, *, c):
    x16 = _bf16(x_ref[...])                                   # (C, N)

    # Fused q/k/v 1x1-conv projections: ONE (3c, C) x (C, N) MXU matmul.
    qkv = jnp.dot(wqkv_ref[...], x16,
                  preferred_element_type=jnp.float32) + bqkv_ref[...]
    qkv16 = _bf16(qkv)                                        # single hoisted cast
    q = qkv16[0 * c:1 * c]                                    # (c, N)
    k = qkv16[1 * c:2 * c]
    v = qkv16[2 * c:3 * c]

    # FMCM[i, j] = sum_n q[i, n] k[j, n]                      -> (c, c)
    fmcm = jax.lax.dot_general(q, k, (((1,), (1,)), ((), ())),
                               preferred_element_type=jnp.float32)
    # Exact softmax over j (tiny op; approximate reciprocal removed).
    fmcm = fmcm - jnp.max(fmcm, axis=1, keepdims=True)
    e = jnp.exp(fmcm)
    awm = e / jnp.sum(e, axis=1, keepdims=True)

    # AV^T[j, n] = sum_i AWM[i, j] v[i, n]                    -> (c, N)
    avt = jax.lax.dot_general(_bf16(awm), v, (((0,), (0,)), ((), ())),
                              preferred_element_type=jnp.float32)
    avt16 = _bf16(avt)
    avt_ref[...] = avt16                                      # bf16 hand-off

    # Per-batch BN partials on the same bf16 values phase 2 will consume:
    #   m_b = sum_n AV^T,  G_b = AV^T AV^T^T   (Gram trick: o1 never stored).
    m_ref[...] = jnp.sum(avt16.astype(jnp.float32), axis=1, keepdims=True)
    g_ref[...] = jax.lax.dot_general(avt16, avt16, (((1,), (1,)), ((), ())),
                                     preferred_element_type=jnp.float32)


# --------------------------------------------------------------------------
# Phase 2 (grid over B, parallel): global BN stats from the partials, fold
# conv_wg + BN affine + out-conv into Weff, fused output matmul + residual.
# --------------------------------------------------------------------------
def _bn_out_kernel(m_ref, g_ref, avt_ref, x_ref, wwg_ref, gamma_ref, beta_ref,
                   wout_ref, bout_ref, o_ref, *, count):
    inv_cnt = 1.0 / float(count)
    # Use the bf16-rounded weight values (as the reference's MXU operands do)
    # but do all the tiny stat math in f32.
    wwg = wwg_ref[...].astype(jnp.float32)                    # (c, c)
    wout = wout_ref[...].astype(jnp.float32)                  # (plane, c)

    msum = jnp.sum(m_ref[...], axis=0)                        # (c, 1)
    gsum = jnp.sum(g_ref[...], axis=0)                        # (c, c)

    # o1 = Wwg @ AV^T  (never materialized):
    #   mu_i     = (Wwg m)_i / (B*N)
    #   E[o1_i^2] = (Wwg G Wwg^T)_ii / (B*N)
    mu = jnp.dot(wwg, msum, preferred_element_type=jnp.float32) * inv_cnt
    t = jnp.dot(wwg, gsum, preferred_element_type=jnp.float32)     # (c, c)
    ex2 = jnp.sum(t * wwg, axis=1, keepdims=True) * inv_cnt        # (c, 1)
    var = ex2 - mu * mu                                            # biased var

    scale = gamma_ref[...] * jax.lax.rsqrt(var + _EPS)             # (c, 1)
    shift = beta_ref[...] - mu * scale

    # Fold conv_wg + BN affine + out-conv: Weff = Wout diag(scale) Wwg.
    weff = jnp.dot(wout, wwg * scale, preferred_element_type=jnp.float32)
    beff = jnp.dot(wout, shift, preferred_element_type=jnp.float32) \
        + bout_ref[...]                                            # (plane, 1)

    o2 = jnp.dot(_bf16(weff), avt_ref[...],
                 preferred_element_type=jnp.float32) + beff        # (plane, N)
    o_ref[...] = jnp.maximum(o2 + x_ref[...], 0.0)


def cma_forward(x_nchw, params):
    B, C, H, W = x_nchw.shape
    N = H * W
    c = params["Wwg"].shape[0]

    # Natural layout: (B, C, N).  Pure reshape (contiguous), no HBM transpose.
    x = x_nchw.reshape(B, C, N).astype(jnp.float32)

    # Fused q/k/v weight & bias (row order: q, k, v).
    wqkv = _bf16(jnp.concatenate([params["Wq"], params["Wk"], params["Wv"]], 0))
    bqkv = jnp.concatenate([params["bq"], params["bk"], params["bv"]],
                           0).astype(jnp.float32)

    par = pltpu.CompilerParams(dimension_semantics=("parallel",))

    # Phase 1: per-batch affinity attention + BN partial stats.
    avt, m_part, g_part = pl.pallas_call(
        functools.partial(_affinity_kernel, c=c),
        grid=(B,),
        in_specs=[
            pl.BlockSpec((None, C, N), lambda b: (b, 0, 0)),      # x tile
            pl.BlockSpec((3 * c, C), lambda b: (0, 0)),           # resident
            pl.BlockSpec((3 * c, 1), lambda b: (0, 0)),
        ],
        out_specs=[
            pl.BlockSpec((None, c, N), lambda b: (b, 0, 0)),      # AV^T (bf16)
            pl.BlockSpec((None, c, 1), lambda b: (b, 0, 0)),      # row sums
            pl.BlockSpec((None, c, c), lambda b: (b, 0, 0)),      # Gram
        ],
        out_shape=[
            jax.ShapeDtypeStruct((B, c, N), jnp.bfloat16),
            jax.ShapeDtypeStruct((B, c, 1), jnp.float32),
            jax.ShapeDtypeStruct((B, c, c), jnp.float32),
        ],
        compiler_params=par,
    )(x, wqkv, bqkv)

    # Phase 2: global BN stats + fused conv_wg/BN/out-conv + residual + ReLU.
    # TODO(synk): BatchNorm1d running-stat (momentum) buffer updates are a
    # training-time side effect and are not produced here.
    out = pl.pallas_call(
        functools.partial(_bn_out_kernel, count=B * N),
        grid=(B,),
        in_specs=[
            pl.BlockSpec((B, c, 1), lambda b: (0, 0, 0)),         # all partials
            pl.BlockSpec((B, c, c), lambda b: (0, 0, 0)),
            pl.BlockSpec((None, c, N), lambda b: (b, 0, 0)),      # AV^T tile
            pl.BlockSpec((None, C, N), lambda b: (b, 0, 0)),      # residual x
            pl.BlockSpec((c, c), lambda b: (0, 0)),               # Wwg
            pl.BlockSpec((c, 1), lambda b: (0, 0)),               # gamma
            pl.BlockSpec((c, 1), lambda b: (0, 0)),               # beta
            pl.BlockSpec((C, c), lambda b: (0, 0)),               # Wout
            pl.BlockSpec((C, 1), lambda b: (0, 0)),               # bout
        ],
        out_specs=pl.BlockSpec((None, C, N), lambda b: (b, 0, 0)),
        out_shape=jax.ShapeDtypeStruct((B, C, N), jnp.float32),
        compiler_params=par,
    )(m_part, g_part, avt, x,
      _bf16(params["Wwg"]), params["gamma"], params["beta"],
      _bf16(params["Wout"]), params["bout"])

    return out.reshape(B, C, H, W)


def init_params(key, plane):
    c = plane // 2
    ks = jax.random.split(key, 9)

    def w(k, shape, fan_in):
        return jax.random.normal(k, shape, jnp.float32) / jnp.sqrt(float(fan_in))

    return dict(
        Wv=w(ks[0], (c, plane), plane), bv=w(ks[1], (c, 1), plane),
        Wk=w(ks[2], (c, plane), plane), bk=w(ks[3], (c, 1), plane),
        Wq=w(ks[4], (c, plane), plane), bq=w(ks[5], (c, 1), plane),
        Wwg=w(ks[6], (c, c), c),
        gamma=jnp.ones((c, 1), jnp.float32),
        beta=jnp.zeros((c, 1), jnp.float32),
        Wout=w(ks[7], (plane, c), c), bout=w(ks[8], (plane, 1), c),
    )


def cma_ref(x_nchw, p):
    # Straightforward implementation of the PyTorch module, using the same
    # bf16-operand / f32-accumulate matmul precision as the kernel.
    B, C, H, W = x_nchw.shape
    N = H * W
    x = x_nchw.reshape(B, C, N).astype(jnp.float32)

    def proj(Wm, bm):
        return jnp.einsum("ij,bjn->bin", _bf16(Wm), _bf16(x),
                          preferred_element_type=jnp.float32) + bm[None]

    v = proj(p["Wv"], p["bv"])
    k = proj(p["Wk"], p["bk"])
    q = proj(p["Wq"], p["bq"])
    fmcm = jnp.einsum("bin,bjn->bij", _bf16(q), _bf16(k),
                      preferred_element_type=jnp.float32)
    awm = jax.nn.softmax(fmcm, axis=2)
    avt = jnp.einsum("bji,bjn->bin", _bf16(awm), _bf16(v),
                     preferred_element_type=jnp.float32)
    o1 = jnp.einsum("ij,bjn->bin", _bf16(p["Wwg"]), _bf16(avt),
                    preferred_element_type=jnp.float32)
    mu = jnp.mean(o1, axis=(0, 2), keepdims=True)
    var = jnp.mean((o1 - mu) ** 2, axis=(0, 2), keepdims=True)
    y = p["gamma"][None] * (o1 - mu) * jax.lax.rsqrt(var + _EPS) + p["beta"][None]
    o2 = jnp.einsum("oi,bin->bon", _bf16(p["Wout"]), _bf16(y),
                    preferred_element_type=jnp.float32) + p["bout"][None]
    return jnp.maximum(o2 + x, 0.0).reshape(B, C, H, W)


if __name__ == "__main__":
    plane = 16            # -> inter_plane c = 8
    B, H, W = 2, 16, 16   # N = 256

    key = jax.random.PRNGKey(0)
    kx, kp = jax.random.split(key)
    x = jax.random.normal(kx, (B, plane, H, W), jnp.float32)
    params = init_params(kp, plane)

    out = jax.block_until_ready(jax.jit(cma_forward)(x, params))
    ref = cma_ref(x, params)

    assert out.shape == x.shape
    err = float(jnp.max(jnp.abs(out - ref)))
    scale = float(jnp.max(jnp.abs(ref)))
    # bf16 operands (~2^-8 relative) through three matmul layers with
    # unscaled channel-affinity logits: allow 2% of the output dynamic range.
    assert err <= 2e-2 * max(scale, 1.0), (err, scale)
    print("KERNEL_OK")
</pallas_src>

<mosaic_0001>
module attributes {stable_mosaic.version = 11 : i64} {
  func.func @_affinity_kernel(%arg0: i32, %arg1: memref<1x16x256xf32, #tpu.memory_space<vmem>>, %arg2: memref<24x16xbf16, #tpu.memory_space<vmem>>, %arg3: memref<24x1xf32, #tpu.memory_space<vmem>>, %arg4: memref<1x8x256xbf16, #tpu.memory_space<vmem>>, %arg5: memref<1x8x1xf32, #tpu.memory_space<vmem>>, %arg6: memref<1x8x8xf32, #tpu.memory_space<vmem>>) attributes {dimension_semantics = [#tpu.dimension_semantics<parallel>], iteration_bounds = array<i64: 2>, scalar_prefetch = 0 : i64, scratch_operands = 0 : i64, tpu.core_type = #tpu.core_type<tc>, window_params = [{transform_indices = @transform_0, window_bounds = array<i64: 1, 16, 256>}, {pipeline_mode = #tpu.pipeline_mode<synchronous>, transform_indices = @transform_1, window_bounds = array<i64: 24, 16>}, {pipeline_mode = #tpu.pipeline_mode<synchronous>, transform_indices = @transform_2, window_bounds = array<i64: 24, 1>}, {transform_indices = @transform_3, window_bounds = array<i64: 1, 8, 256>}, {transform_indices = @transform_4, window_bounds = array<i64: 1, 8, 1>}, {transform_indices = @transform_5, window_bounds = array<i64: 1, 8, 8>}]} {
    %c0 = arith.constant 0 : index
    %c0_0 = arith.constant 0 : index
    %c0_1 = arith.constant 0 : index
    %0 = vector.load %arg1[%c0, %c0_0, %c0_1] : memref<1x16x256xf32, #tpu.memory_space<vmem>>, vector<1x16x256xf32>
    %1 = vector.shape_cast %0 : vector<1x16x256xf32> to vector<16x256xf32>
    %2 = arith.truncf %1 : vector<16x256xf32> to vector<16x256xbf16>
    %c0_2 = arith.constant 0 : index
    %c0_3 = arith.constant 0 : index
    %3 = vector.load %arg2[%c0_2, %c0_3] : memref<24x16xbf16, #tpu.memory_space<vmem>>, vector<24x16xbf16>
    %cst = arith.constant dense<0.000000e+00> : vector<24x256xf32>
    %4 = tpu.matmul %3, %2, %cst {dimension_numbers = #tpu.dot_dimension_numbers<[1], [0], [0], [1], [0, 0, 1, 1], [], []>} : vector<24x16xbf16>, vector<16x256xbf16>, vector<24x256xf32> -> vector<24x256xf32>
    %c0_4 = arith.constant 0 : index
    %c0_5 = arith.constant 0 : index
    %5 = vector.load %arg3[%c0_4, %c0_5] : memref<24x1xf32, #tpu.memory_space<vmem>>, vector<24x1xf32>
    %6 = vector.broadcast %5 : vector<24x1xf32> to vector<24x256xf32>
    %7 = arith.addf %4, %6 : vector<24x256xf32>
    %8 = arith.truncf %7 : vector<24x256xf32> to vector<24x256xbf16>
    %9 = vector.extract_strided_slice %8 {offsets = [0, 0], sizes = [8, 256], strides = [1, 1]} : vector<24x256xbf16> to vector<8x256xbf16>
    %10 = vector.extract_strided_slice %8 {offsets = [8, 0], sizes = [8, 256], strides = [1, 1]} : vector<24x256xbf16> to vector<8x256xbf16>
    %11 = vector.extract_strided_slice %8 {offsets = [16, 0], sizes = [8, 256], strides = [1, 1]} : vector<24x256xbf16> to vector<8x256xbf16>
    %cst_6 = arith.constant dense<0.000000e+00> : vector<8x8xf32>
    %12 = tpu.matmul %9, %10, %cst_6 {dimension_numbers = #tpu.dot_dimension_numbers<[1], [1], [0], [0], [0, 0, 1, 0], [], []>} : vector<8x256xbf16>, vector<8x256xbf16>, vector<8x8xf32> -> vector<8x8xf32>
    %cst_7 = arith.constant dense<0xFF800000> : vector<8xf32>
    %13 = vector.multi_reduction <maximumf>, %12, %cst_7 [1] : vector<8x8xf32> to vector<8xf32>
    %14 = vector.shape_cast %13 : vector<8xf32> to vector<8x1xf32>
    %15 = vector.broadcast %14 : vector<8x1xf32> to vector<8x8xf32>
    %16 = arith.subf %12, %15 : vector<8x8xf32>
    %17 = math.exp %16 : vector<8x8xf32>
    %cst_8 = arith.constant dense<0.000000e+00> : vector<8xf32>
    %18 = vector.multi_reduction <add>, %17, %cst_8 [1] : vector<8x8xf32> to vector<8xf32>
    %19 = vector.shape_cast %18 : vector<8xf32> to vector<8x1xf32>
    %20 = vector.broadcast %19 : vector<8x1xf32> to vector<8x8xf32>
    %21 = arith.divf %17, %20 : vector<8x8xf32>
    %22 = arith.truncf %21 : vector<8x8xf32> to vector<8x8xbf16>
    %cst_9 = arith.constant dense<0.000000e+00> : vector<8x256xf32>
    %23 = tpu.matmul %22, %11, %cst_9 {dimension_numbers = #tpu.dot_dimension_numbers<[0], [0], [1], [1], [0, 1, 1, 1], [], []>} : vector<8x8xbf16>, vector<8x256xbf16>, vector<8x256xf32> -> vector<8x256xf32>
    %24 = arith.truncf %23 : vector<8x256xf32> to vector<8x256xbf16>
    %c0_10 = arith.constant 0 : index
    %c0_11 = arith.constant 0 : index
    %c0_12 = arith.constant 0 : index
    %25 = vector.load %arg4[%c0_10, %c0_11, %c0_12] : memref<1x8x256xbf16, #tpu.memory_space<vmem>>, vector<1x8x256xbf16>
    %26 = vector.shape_cast %25 : vector<1x8x256xbf16> to vector<8x256xbf16>
    %27 = vector.shape_cast %24 : vector<8x256xbf16> to vector<1x8x256xbf16>
    tpu.vector_store %arg4[%c0_10, %c0_11, %c0_12], %27 {strides = array<i32>} : memref<1x8x256xbf16, #tpu.memory_space<vmem>>, vector<1x8x256xbf16>,
    %28 = arith.extf %24 : vector<8x256xbf16> to vector<8x256xf32>
    %cst_13 = arith.constant dense<0.000000e+00> : vector<8xf32>
    %29 = vector.multi_reduction <add>, %28, %cst_13 [1] : vector<8x256xf32> to vector<8xf32>
    %30 = vector.shape_cast %29 : vector<8xf32> to vector<8x1xf32>
    %c0_14 = arith.constant 0 : index
    %c0_15 = arith.constant 0 : index
    %c0_16 = arith.constant 0 : index
    %31 = vector.load %arg5[%c0_14, %c0_15, %c0_16] : memref<1x8x1xf32, #tpu.memory_space<vmem>>, vector<1x8x1xf32>
    %32 = vector.shape_cast %31 : vector<1x8x1xf32> to vector<8x1xf32>
    %33 = vector.shape_cast %30 : vector<8x1xf32> to vector<1x8x1xf32>
    tpu.vector_store %arg5[%c0_14, %c0_15, %c0_16], %33 {strides = array<i32>} : memref<1x8x1xf32, #tpu.memory_space<vmem>>, vector<1x8x1xf32>,
    %cst_17 = arith.constant dense<0.000000e+00> : vector<8x8xf32>
    %34 = tpu.matmul %24, %24, %cst_17 {dimension_numbers = #tpu.dot_dimension_numbers<[1], [1], [0], [0], [0, 0, 1, 0], [], []>} : vector<8x256xbf16>, vector<8x256xbf16>, vector<8x8xf32> -> vector<8x8xf32>
    %c0_18 = arith.constant 0 : index
    %c0_19 = arith.constant 0 : index
    %c0_20 = arith.constant 0 : index
    %35 = vector.load %arg6[%c0_18, %c0_19, %c0_20] : memref<1x8x8xf32, #tpu.memory_space<vmem>>, vector<1x8x8xf32>
    %36 = vector.shape_cast %35 : vector<1x8x8xf32> to vector<8x8xf32>
    %37 = vector.shape_cast %34 : vector<8x8xf32> to vector<1x8x8xf32>
    tpu.vector_store %arg6[%c0_18, %c0_19, %c0_20], %37 {strides = array<i32>} : memref<1x8x8xf32, #tpu.memory_space<vmem>>, vector<1x8x8xf32>,
    return
  }
  func.func @transform_0(%arg0: i32) -> (i32, i32, i32) {
    %c0_i32 = arith.constant 0 : i32
    %c0_i32_0 = arith.constant 0 : i32
    %c0_i32_1 = arith.constant 0 : i32
    return %arg0, %c0_i32, %c0_i32_0 : i32, i32, i32
  }
  func.func @transform_1(%arg0: i32) -> (i32, i32) {
    %c0_i32 = arith.constant 0 : i32
    %c0_i32_0 = arith.constant 0 : i32
    %c0_i32_1 = arith.constant 0 : i32
    return %c0_i32, %c0_i32_0 : i32, i32
  }
  func.func @transform_2(%arg0: i32) -> (i32, i32) {
    %c0_i32 = arith.constant 0 : i32
    %c0_i32_0 = arith.constant 0 : i32
    %c0_i32_1 = arith.constant 0 : i32
    return %c0_i32, %c0_i32_0 : i32, i32
  }
  func.func @transform_3(%arg0: i32) -> (i32, i32, i32) {
    %c0_i32 = arith.constant 0 : i32
    %c0_i32_0 = arith.constant 0 : i32
    %c0_i32_1 = arith.constant 0 : i32
    return %arg0, %c0_i32, %c0_i32_0 : i32, i32, i32
  }
  func.func @transform_4(%arg0: i32) -> (i32, i32, i32) {
    %c0_i32 = arith.constant 0 : i32
    %c0_i32_0 = arith.constant 0 : i32
    %c0_i32_1 = arith.constant 0 : i32
    return %arg0, %c0_i32, %c0_i32_0 : i32, i32, i32
  }
  func.func @transform_5(%arg0: i32) -> (i32, i32, i32) {
    %c0_i32 = arith.constant 0 : i32
    %c0_i32_0 = arith.constant 0 : i32
    %c0_i32_1 = arith.constant 0 : i32
    return %arg0, %c0_i32, %c0_i32_0 : i32, i32, i32
  }
}

module attributes {stable_mosaic.version = 11 : i64} {
  func.func @_bn_out_kernel(%arg0: i32, %arg1: memref<2x8x1xf32, #tpu.memory_space<vmem>>, %arg2: memref<2x8x8xf32, #tpu.memory_space<vmem>>, %arg3: memref<1x8x256xbf16, #tpu.memory_space<vmem>>, %arg4: memref<1x16x256xf32, #tpu.memory_space<vmem>>, %arg5: memref<8x8xbf16, #tpu.memory_space<vmem>>, %arg6: memref<8x1xf32, #tpu.memory_space<vmem>>, %arg7: memref<8x1xf32, #tpu.memory_space<vmem>>, %arg8: memref<16x8xbf16, #tpu.memory_space<vmem>>, %arg9: memref<16x1xf32, #tpu.memory_space<vmem>>, %arg10: memref<1x16x256xf32, #tpu.memory_space<vmem>>) attributes {dimension_semantics = [#tpu.dimension_semantics<parallel>], iteration_bounds = array<i64: 2>, scalar_prefetch = 0 : i64, scratch_operands = 0 : i64, tpu.core_type = #tpu.core_type<tc>, window_params = [{pipeline_mode = #tpu.pipeline_mode<synchronous>, transform_indices = @transform_0, window_bounds = array<i64: 2, 8, 1>}, {pipeline_mode = #tpu.pipeline_mode<synchronous>, transform_indices = @transform_1, window_bounds = array<i64: 2, 8, 8>}, {transform_indices = @transform_2, window_bounds = array<i64: 1, 8, 256>}, {transform_indices = @transform_3, window_bounds = array<i64: 1, 16, 256>}, {pipeline_mode = #tpu.pipeline_mode<synchronous>, transform_indices = @transform_4, window_bounds = array<i64: 8, 8>}, {pipeline_mode = #tpu.pipeline_mode<synchronous>, transform_indices = @transform_5, window_bounds = array<i64: 8, 1>}, {pipeline_mode = #tpu.pipeline_mode<synchronous>, transform_indices = @transform_6, window_bounds = array<i64: 8, 1>}, {pipeline_mode = #tpu.pipeline_mode<synchronous>, transform_indices = @transform_7, window_bounds = array<i64: 16, 8>}, {pipeline_mode = #tpu.pipeline_mode<synchronous>, transform_indices = @transform_8, window_bounds = array<i64: 16, 1>}, {transform_indices = @transform_9, window_bounds = array<i64: 1, 16, 256>}]} {
    %c0 = arith.constant 0 : index
    %c0_0 = arith.constant 0 : index
    %0 = vector.load %arg5[%c0, %c0_0] : memref<8x8xbf16, #tpu.memory_space<vmem>>, vector<8x8xbf16>
    %1 = arith.extf %0 : vector<8x8xbf16> to vector<8x8xf32>
    %c0_1 = arith.constant 0 : index
    %c0_2 = arith.constant 0 : index
    %2 = vector.load %arg8[%c0_1, %c0_2] : memref<16x8xbf16, #tpu.memory_space<vmem>>, vector<16x8xbf16>
    %3 = arith.extf %2 : vector<16x8xbf16> to vector<16x8xf32>
    %c0_3 = arith.constant 0 : index
    %c0_4 = arith.constant 0 : index
    %c0_5 = arith.constant 0 : index
    %4 = vector.load %arg1[%c0_3, %c0_4, %c0_5] : memref<2x8x1xf32, #tpu.memory_space<vmem>>, vector<2x8x1xf32>
    %cst = arith.constant dense<0.000000e+00> : vector<8x1xf32>
    %5 = vector.multi_reduction <add>, %4, %cst [0] : vector<2x8x1xf32> to vector<8x1xf32>
    %c0_6 = arith.constant 0 : index
    %c0_7 = arith.constant 0 : index
    %c0_8 = arith.constant 0 : index
    %6 = vector.load %arg2[%c0_6, %c0_7, %c0_8] : memref<2x8x8xf32, #tpu.memory_space<vmem>>, vector<2x8x8xf32>
    %cst_9 = arith.constant dense<0.000000e+00> : vector<8x8xf32>
    %7 = vector.multi_reduction <add>, %6, %cst_9 [0] : vector<2x8x8xf32> to vector<8x8xf32>
    %cst_10 = arith.constant dense<0.000000e+00> : vector<8x1xf32>
    %8 = tpu.matmul %1, %5, %cst_10 {dimension_numbers = #tpu.dot_dimension_numbers<[1], [0], [0], [1], [0, 0, 1, 1], [], []>} : vector<8x8xf32>, vector<8x1xf32>, vector<8x1xf32> -> vector<8x1xf32>
    %cst_11 = arith.constant 0.001953125 : f32
    %9 = vector.broadcast %cst_11 : f32 to vector<8x1xf32>
    %10 = arith.mulf %8, %9 : vector<8x1xf32>
    %cst_12 = arith.constant dense<0.000000e+00> : vector<8x8xf32>
    %11 = tpu.matmul %1, %7, %cst_12 {dimension_numbers = #tpu.dot_dimension_numbers<[1], [0], [0], [1], [0, 0, 1, 1], [], []>} : vector<8x8xf32>, vector<8x8xf32>, vector<8x8xf32> -> vector<8x8xf32>
    %12 = arith.mulf %11, %1 : vector<8x8xf32>
    %cst_13 = arith.constant dense<0.000000e+00> : vector<8xf32>
    %13 = vector.multi_reduction <add>, %12, %cst_13 [1] : vector<8x8xf32> to vector<8xf32>
    %14 = vector.shape_cast %13 : vector<8xf32> to vector<8x1xf32>
    %cst_14 = arith.constant 0.001953125 : f32
    %15 = vector.broadcast %cst_14 : f32 to vector<8x1xf32>
    %16 = arith.mulf %14, %15 : vector<8x1xf32>
    %17 = arith.mulf %10, %10 : vector<8x1xf32>
    %18 = arith.subf %16, %17 : vector<8x1xf32>
    %c0_15 = arith.constant 0 : index
    %c0_16 = arith.constant 0 : index
    %19 = vector.load %arg6[%c0_15, %c0_16] : memref<8x1xf32, #tpu.memory_space<vmem>>, vector<8x1xf32>
    %cst_17 = arith.constant 9.99999974E-6 : f32
    %20 = vector.broadcast %cst_17 : f32 to vector<8x1xf32>
    %21 = arith.addf %18, %20 : vector<8x1xf32>
    %22 = math.rsqrt %21 : vector<8x1xf32>
    %23 = arith.mulf %19, %22 : vector<8x1xf32>
    %c0_18 = arith.constant 0 : index
    %c0_19 = arith.constant 0 : index
    %24 = vector.load %arg7[%c0_18, %c0_19] : memref<8x1xf32, #tpu.memory_space<vmem>>, vector<8x1xf32>
    %25 = arith.mulf %10, %23 : vector<8x1xf32>
    %26 = arith.subf %24, %25 : vector<8x1xf32>
    %27 = vector.broadcast %23 : vector<8x1xf32> to vector<8x8xf32>
    %28 = arith.mulf %1, %27 : vector<8x8xf32>
    %cst_20 = arith.constant dense<0.000000e+00> : vector<16x8xf32>
    %29 = tpu.matmul %3, %28, %cst_20 {dimension_numbers = #tpu.dot_dimension_numbers<[1], [0], [0], [1], [0, 0, 1, 1], [], []>} : vector<16x8xf32>, vector<8x8xf32>, vector<16x8xf32> -> vector<16x8xf32>
    %cst_21 = arith.constant dense<0.000000e+00> : vector<16x1xf32>
    %30 = tpu.matmul %3, %26, %cst_21 {dimension_numbers = #tpu.dot_dimension_numbers<[1], [0], [0], [1], [0, 0, 1, 1], [], []>} : vector<16x8xf32>, vector<8x1xf32>, vector<16x1xf32> -> vector<16x1xf32>
    %c0_22 = arith.constant 0 : index
    %c0_23 = arith.constant 0 : index
    %31 = vector.load %arg9[%c0_22, %c0_23] : memref<16x1xf32, #tpu.memory_space<vmem>>, vector<16x1xf32>
    %32 = arith.addf %30, %31 : vector<16x1xf32>
    %33 = arith.truncf %29 : vector<16x8xf32> to vector<16x8xbf16>
    %c0_24 = arith.constant 0 : index
    %c0_25 = arith.constant 0 : index
    %c0_26 = arith.constant 0 : index
    %34 = vector.load %arg3[%c0_24, %c0_25, %c0_26] : memref<1x8x256xbf16, #tpu.memory_space<vmem>>, vector<1x8x256xbf16>
    %35 = vector.shape_cast %34 : vector<1x8x256xbf16> to vector<8x256xbf16>
    %cst_27 = arith.constant dense<0.000000e+00> : vector<16x256xf32>
    %36 = tpu.matmul %33, %35, %cst_27 {dimension_numbers = #tpu.dot_dimension_numbers<[1], [0], [0], [1], [0, 0, 1, 1], [], []>} : vector<16x8xbf16>, vector<8x256xbf16>, vector<16x256xf32> -> vector<16x256xf32>
    %37 = vector.broadcast %32 : vector<16x1xf32> to vector<16x256xf32>
    %38 = arith.addf %36, %37 : vector<16x256xf32>
    %c0_28 = arith.constant 0 : index
    %c0_29 = arith.constant 0 : index
    %c0_30 = arith.constant 0 : index
    %39 = vector.load %arg4[%c0_28, %c0_29, %c0_30] : memref<1x16x256xf32, #tpu.memory_space<vmem>>, vector<1x16x256xf32>
    %40 = vector.shape_cast %39 : vector<1x16x256xf32> to vector<16x256xf32>
    %41 = arith.addf %38, %40 : vector<16x256xf32>
    %cst_31 = arith.constant 0.000000e+00 : f32
    %42 = vector.broadcast %cst_31 : f32 to vector<16x256xf32>
    %43 = arith.maximumf %41, %42 : vector<16x256xf32>
    %c0_32 = arith.constant 0 : index
    %c0_33 = arith.constant 0 : index
    %c0_34 = arith.constant 0 : index
    %44 = vector.load %arg10[%c0_32, %c0_33, %c0_34] : memref<1x16x256xf32, #tpu.memory_space<vmem>>, vector<1x16x256xf32>
    %45 = vector.shape_cast %44 : vector<1x16x256xf32> to vector<16x256xf32>
    %46 = vector.shape_cast %43 : vector<16x256xf32> to vector<1x16x256xf32>
    tpu.vector_store %arg10[%c0_32, %c0_33, %c0_34], %46 {strides = array<i32>} : memref<1x16x256xf32, #tpu.memory_space<vmem>>, vector<1x16x256xf32>,
    return
  }
  func.func @transform_0(%arg0: i32) -> (i32, i32, i32) {
    %c0_i32 = arith.constant 0 : i32
    %c0_i32_0 = arith.constant 0 : i32
    %c0_i32_1 = arith.constant 0 : i32
    %c0_i32_2 = arith.constant 0 : i32
    return %c0_i32, %c0_i32_0, %c0_i32_1 : i32, i32, i32
  }
  func.func @transform_1(%arg0: i32) -> (i32, i32, i32) {
    %c0_i32 = arith.constant 0 : i32
    %c0_i32_0 = arith.constant 0 : i32
    %c0_i32_1 = arith.constant 0 : i32
    %c0_i32_2 = arith.constant 0 : i32
    return %c0_i32, %c0_i32_0, %c0_i32_1 : i32, i32, i32
  }
  func.func @transform_2(%arg0: i32) -> (i32, i32, i32) {
    %c0_i32 = arith.constant 0 : i32
    %c0_i32_0 = arith.constant 0 : i32
    %c0_i32_1 = arith.constant 0 : i32
    return %arg0, %c0_i32, %c0_i32_0 : i32, i32, i32
  }
  func.func @transform_3(%arg0: i32) -> (i32, i32, i32) {
    %c0_i32 = arith.constant 0 : i32
    %c0_i32_0 = arith.constant 0 : i32
    %c0_i32_1 = arith.constant 0 : i32
    return %arg0, %c0_i32, %c0_i32_0 : i32, i32, i32
  }
  func.func @transform_4(%arg0: i32) -> (i32, i32) {
    %c0_i32 = arith.constant 0 : i32
    %c0_i32_0 = arith.constant 0 : i32
    %c0_i32_1 = arith.constant 0 : i32
    return %c0_i32, %c0_i32_0 : i32, i32
  }
  func.func @transform_5(%arg0: i32) -> (i32, i32) {
    %c0_i32 = arith.constant 0 : i32
    %c0_i32_0 = arith.constant 0 : i32
    %c0_i32_1 = arith.constant 0 : i32
    return %c0_i32, %c0_i32_0 : i32, i32
  }
  func.func @transform_6(%arg0: i32) -> (i32, i32) {
    %c0_i32 = arith.constant 0 : i32
    %c0_i32_0 = arith.constant 0 : i32
    %c0_i32_1 = arith.constant 0 : i32
    return %c0_i32, %c0_i32_0 : i32, i32
  }
  func.func @transform_7(%arg0: i32) -> (i32, i32) {
    %c0_i32 = arith.constant 0 : i32
    %c0_i32_0 = arith.constant 0 : i32
    %c0_i32_1 = arith.constant 0 : i32
    return %c0_i32, %c0_i32_0 : i32, i32
  }
  func.func @transform_8(%arg0: i32) -> (i32, i32) {
    %c0_i32 = arith.constant 0 : i32
    %c0_i32_0 = arith.constant 0 : i32
    %c0_i32_1 = arith.constant 0 : i32
    return %c0_i32, %c0_i32_0 : i32, i32
  }
  func.func @transform_9(%arg0: i32) -> (i32, i32, i32) {
    %c0_i32 = arith.constant 0 : i32
    %c0_i32_0 = arith.constant 0 : i32
    %c0_i32_1 = arith.constant 0 : i32
    return %arg0, %c0_i32, %c0_i32_0 : i32, i32, i32
  }
}

</mosaic_0001>

<llo_original>
// kernel: cma_forward.3
$region0: #{cma_forward.3}
  #allocation0 [shape = 'u32[]', space=smem, size = 0x4, offset = 0x4, fixed_abs, tag = 'smem constant byte address 0x4 - core index']
  #allocation1 [shape = 'u32[144,128]{1,0:T(1,128)}', space=vmem, size = 0x12000, scoped, tag = 'internal scratch']
  %s0 = inlined_call_operand.vmem [shape: f32[2,8,1], index: 0, kind: input, shape index: {}]
  %s1 = inlined_call_operand.vmem [shape: f32[2,8,8], index: 1, kind: input, shape index: {}]
  %s2 = inlined_call_operand.vmem [shape: bf16[2,8,256], index: 2, kind: input, shape index: {}]
  %s3 = inlined_call_operand.vmem [shape: f32[2,16,256], index: 3, kind: input, shape index: {}]
  %s4 = inlined_call_operand.vmem [shape: bf16[8,8], index: 4, kind: input, shape index: {}]
  %s5 = inlined_call_operand.vmem [shape: f32[8,1], index: 5, kind: input, shape index: {}]
  %s6 = inlined_call_operand.vmem [shape: f32[8,1], index: 6, kind: input, shape index: {}]
  %s7 = inlined_call_operand.vmem [shape: bf16[16,8], index: 7, kind: input, shape index: {}]
  %s8 = inlined_call_operand.vmem [shape: f32[16,1], index: 8, kind: input, shape index: {}]
  %s9 = inlined_call_operand.vmem [shape: f32[2,16,256], index: 9, kind: output, shape index: {}]
  %s10 = sld [smem:[#allocation0]]
  $region69: #{cma_forward.3} parent=0
    _
  %s12 = ssub.s32 1, %s10
  %s13 = scalar_select 0, %s12, %s10
  loop: start=0, step=1, limit=4
  $region2: #{cma_forward.3} parent=0 // loop_pre_header
    _
  $region3: #{cma_forward.3} parent=0 // loop_header
    %s15 = sphi 0, %s19
    %p16 = scmp.ge.s32.totalorder %s15, 4
    %s23 = sphi 0, %s23
    %s25 = sphi 0, %s23
    %s26 = sphi 0, %s25
    %s40 = sphi 0, %s26
    %s44 = sphi 0, %s44
    %s46 = sphi 0, %s44
    %s47 = sphi 0, %s46
    %s61 = sphi 0, %s47
    %s67 = sphi 0, %s69
    %s70 = sphi 0, %s67
    %s71 = sphi 0, %s70
    %s87 = sphi 0, %s71
    %s93 = sphi 0, %s95
    %s96 = sphi 0, %s93
    %s97 = sphi 0, %s96
    %s113 = sphi 0, %s97
    %s117 = sphi 0, %s117
    %s119 = sphi 0, %s117
    %s120 = sphi 0, %s119
    %s134 = sphi 0, %s120
    %s138 = sphi 0, %s138
    %s140 = sphi 0, %s138
    %s141 = sphi 0, %s140
    %s155 = sphi 0, %s141
    %s159 = sphi 0, %s159
    %s161 = sphi 0, %s159
    %s162 = sphi 0, %s161
    %s176 = sphi 0, %s162
    %s180 = sphi 0, %s180
    %s182 = sphi 0, %s180
    %s183 = sphi 0, %s182
    %s197 = sphi 0, %s183
    %s201 = sphi 0, %s201
    %s203 = sphi 0, %s201
    %s204 = sphi 0, %s203
    %s218 = sphi 0, %s204
    %s224 = sphi 0, %s226
    %s227 = sphi 0, %s224
    %s228 = sphi 0, %s227
    %s244 = sphi 0, %s228
  $region4: #{cma_forward.3} parent=0 // loop_header_branch
    %18 = sbr.rel (%p16) target = $region8
  $region5: #{cma_forward.3} parent=0 // loop_body
    %s20 = ssub.s32 %s15, 1
    %s21 = ssub.s32 %s15, 2
    %s22 = sadd.s32 %s15, 1
    %s24 = sadd.s32 %s23, 1
    %p27 = scmp.eq.s32.totalorder %s15, 1
    %p28 = scmp.ne.s32.totalorder %s23, %s25
    %p29 = scmp.eq.s32.totalorder %s15, 0
    %p30 = por %p28, %p29
    %p31 = scmp.ne.s32.totalorder %s23, %s25
    %p32 = scmp.eq.s32.totalorder %s20, 1
    %p33 = por %p31, %p32
    %p34 = scmp.ne.s32.totalorder %s25, %s26
    %p35 = scmp.eq.s32.totalorder %s20, 0
    %p36 = por %p34, %p35
    %p37 = scmp.ne.s32.totalorder %s25, %s26
    %p38 = scmp.eq.s32.totalorder %s21, 1
    %p39 = por %p37, %p38
    %p41 = scmp.ne.s32.totalorder %s26, %s40
    %p42 = scmp.eq.s32.totalorder %s21, 0
    %p43 = por %p41, %p42
    %s45 = sadd.s32 %s44, 1
    %p48 = scmp.eq.s32.totalorder %s15, 1
    %p49 = scmp.ne.s32.totalorder %s44, %s46
    %p50 = scmp.eq.s32.totalorder %s15, 0
    %p51 = por %p49, %p50
    %p52 = scmp.ne.s32.totalorder %s44, %s46
    %p53 = scmp.eq.s32.totalorder %s20, 1
    %p54 = por %p52, %p53
    %p55 = scmp.ne.s32.totalorder %s46, %s47
    %p56 = scmp.eq.s32.totalorder %s20, 0
    %p57 = por %p55, %p56
    %p58 = scmp.ne.s32.totalorder %s46, %s47
    %p59 = scmp.eq.s32.totalorder %s21, 1
    %p60 = por %p58, %p59
    %p62 = scmp.ne.s32.totalorder %s47, %s61
    %p63 = scmp.eq.s32.totalorder %s21, 0
    %p64 = por %p62, %p63
    %s65 = ssub.s32 %s15, %s22
    %p66 = scmp.eq.s32.totalorder %s65, 0
    %s68 = sadd.s32 %s67, 1
    %s69 = scalar_select %p66, %s67, %s68
    %p72 = pneg %p66
    %p73 = scmp.eq.s32.totalorder %s15, 1
    %p74 = por %p72, %p73
    %p75 = scmp.ne.s32.totalorder %s67, %s70
    %p76 = scmp.eq.s32.totalorder %s15, 0
    %p77 = por %p75, %p76
    %p78 = scmp.ne.s32.totalorder %s67, %s70
    %p79 = scmp.eq.s32.totalorder %s20, 1
    %p80 = por %p78, %p79
    %p81 = scmp.ne.s32.totalorder %s70, %s71
    %p82 = scmp.eq.s32.totalorder %s20, 0
    %p83 = por %p81, %p82
    %p84 = scmp.ne.s32.totalorder %s70, %s71
    %p85 = scmp.eq.s32.totalorder %s21, 1
    %p86 = por %p84, %p85
    %p88 = scmp.ne.s32.totalorder %s71, %s87
    %p89 = scmp.eq.s32.totalorder %s21, 0
    %p90 = por %p88, %p89
    %s91 = ssub.s32 %s15, %s22
    %p92 = scmp.eq.s32.totalorder %s91, 0
    %s94 = sadd.s32 %s93, 1
    %s95 = scalar_select %p92, %s93, %s94
    %p98 = pneg %p92
    %p99 = scmp.eq.s32.totalorder %s15, 1
    %p100 = por %p98, %p99
    %p101 = scmp.ne.s32.totalorder %s93, %s96
    %p102 = scmp.eq.s32.totalorder %s15, 0
    %p103 = por %p101, %p102
    %p104 = scmp.ne.s32.totalorder %s93, %s96
    %p105 = scmp.eq.s32.totalorder %s20, 1
    %p106 = por %p104, %p105
    %p107 = scmp.ne.s32.totalorder %s96, %s97
    %p108 = scmp.eq.s32.totalorder %s20, 0
    %p109 = por %p107, %p108
    %p110 = scmp.ne.s32.totalorder %s96, %s97
    %p111 = scmp.eq.s32.totalorder %s21, 1
    %p112 = por %p110, %p111
    %p114 = scmp.ne.s32.totalorder %s97, %s113
    %p115 = scmp.eq.s32.totalorder %s21, 0
    %p116 = por %p114, %p115
    %s118 = sadd.s32 %s117, 1
    %p121 = scmp.eq.s32.totalorder %s15, 1
    %p122 = scmp.ne.s32.totalorder %s117, %s119
    %p123 = scmp.eq.s32.totalorder %s15, 0
    %p124 = por %p122, %p123
    %p125 = scmp.ne.s32.totalorder %s117, %s119
    %p126 = scmp.eq.s32.totalorder %s20, 1
    %p127 = por %p125, %p126
    %p128 = scmp.ne.s32.totalorder %s119, %s120
    %p129 = scmp.eq.s32.totalorder %s20, 0
    %p130 = por %p128, %p129
    %p131 = scmp.ne.s32.totalorder %s119, %s120
    %p132 = scmp.eq.s32.totalorder %s21, 1
    %p133 = por %p131, %p132
    %p135 = scmp.ne.s32.totalorder %s120, %s134
    %p136 = scmp.eq.s32.totalorder %s21, 0
    %p137 = por %p135, %p136
    %s139 = sadd.s32 %s138, 1
    %p142 = scmp.eq.s32.totalorder %s15, 1
    %p143 = scmp.ne.s32.totalorder %s138, %s140
    %p144 = scmp.eq.s32.totalorder %s15, 0
    %p145 = por %p143, %p144
    %p146 = scmp.ne.s32.totalorder %s138, %s140
    %p147 = scmp.eq.s32.totalorder %s20, 1
    %p148 = por %p146, %p147
    %p149 = scmp.ne.s32.totalorder %s140, %s141
    %p150 = scmp.eq.s32.totalorder %s20, 0
    %p151 = por %p149, %p150
    %p152 = scmp.ne.s32.totalorder %s140, %s141
    %p153 = scmp.eq.s32.totalorder %s21, 1
    %p154 = por %p152, %p153
    %p156 = scmp.ne.s32.totalorder %s141, %s155
    %p157 = scmp.eq.s32.totalorder %s21, 0
    %p158 = por %p156, %p157
    %s160 = sadd.s32 %s159, 1
    %p163 = scmp.eq.s32.totalorder %s15, 1
    %p164 = scmp.ne.s32.totalorder %s159, %s161
    %p165 = scmp.eq.s32.totalorder %s15, 0
    %p166 = por %p164, %p165
    %p167 = scmp.ne.s32.totalorder %s159, %s161
    %p168 = scmp.eq.s32.totalorder %s20, 1
    %p169 = por %p167, %p168
    %p170 = scmp.ne.s32.totalorder %s161, %s162
    %p171 = scmp.eq.s32.totalorder %s20, 0
    %p172 = por %p170, %p171
    %p173 = scmp.ne.s32.totalorder %s161, %s162
    %p174 = scmp.eq.s32.totalorder %s21, 1
    %p175 = por %p173, %p174
    %p177 = scmp.ne.s32.totalorder %s162, %s176
    %p178 = scmp.eq.s32.totalorder %s21, 0
    %p179 = por %p177, %p178
    %s181 = sadd.s32 %s180, 1
    %p184 = scmp.eq.s32.totalorder %s15, 1
    %p185 = scmp.ne.s32.totalorder %s180, %s182
    %p186 = scmp.eq.s32.totalorder %s15, 0
    %p187 = por %p185, %p186
    %p188 = scmp.ne.s32.totalorder %s180, %s182
    %p189 = scmp.eq.s32.totalorder %s20, 1
    %p190 = por %p188, %p189
    %p191 = scmp.ne.s32.totalorder %s182, %s183
    %p192 = scmp.eq.s32.totalorder %s20, 0
    %p193 = por %p191, %p192
    %p194 = scmp.ne.s32.totalorder %s182, %s183
    %p195 = scmp.eq.s32.totalorder %s21, 1
    %p196 = por %p194, %p195
    %p198 = scmp.ne.s32.totalorder %s183, %s197
    %p199 = scmp.eq.s32.totalorder %s21, 0
    %p200 = por %p198, %p199
    %s202 = sadd.s32 %s201, 1
    %p205 = scmp.eq.s32.totalorder %s15, 1
    %p206 = scmp.ne.s32.totalorder %s201, %s203
    %p207 = scmp.eq.s32.totalorder %s15, 0
    %p208 = por %p206, %p207
    %p209 = scmp.ne.s32.totalorder %s201, %s203
    %p210 = scmp.eq.s32.totalorder %s20, 1
    %p211 = por %p209, %p210
    %p212 = scmp.ne.s32.totalorder %s203, %s204
    %p213 = scmp.eq.s32.totalorder %s20, 0
    %p214 = por %p212, %p213
    %p215 = scmp.ne.s32.totalorder %s203, %s204
    %p216 = scmp.eq.s32.totalorder %s21, 1
    %p217 = por %p215, %p216
    %p219 = scmp.ne.s32.totalorder %s204, %s218
    %p220 = scmp.eq.s32.totalorder %s21, 0
    %p221 = por %p219, %p220
    %s222 = ssub.s32 %s15, %s22
    %p223 = scmp.eq.s32.totalorder %s222, 0
    %s225 = sadd.s32 %s224, 1
    %s226 = scalar_select %p223, %s224, %s225
    %p229 = pneg %p223
    %p230 = scmp.eq.s32.totalorder %s15, 1
    %p231 = por %p229, %p230
    %p232 = scmp.ne.s32.totalorder %s224, %s227
    %p233 = scmp.eq.s32.totalorder %s15, 0
    %p234 = por %p232, %p233
    %p235 = scmp.ne.s32.totalorder %s224, %s227
    %p236 = scmp.eq.s32.totalorder %s20, 1
    %p237 = por %p235, %p236
    %p238 = scmp.ne.s32.totalorder %s227, %s228
    %p239 = scmp.eq.s32.totalorder %s20, 0
    %p240 = por %p238, %p239
    %p241 = scmp.ne.s32.totalorder %s227, %s228
    %p242 = scmp.eq.s32.totalorder %s21, 1
    %p243 = por %p241, %p242
    %p245 = scmp.ne.s32.totalorder %s228, %s244
    %p246 = scmp.eq.s32.totalorder %s21, 0
    %p247 = por %p245, %p246
    %p248 = scmp.le.s32.totalorder 1, %s15
    %p249 = scmp.lt.s32.totalorder %s15, 3
    %p250 = pnand %p248, %p249
    %p251 = pneg %p250
    // Predicated region
    $region9: #{cma_forward.3} parent=5 // pred_check
      _
    $region10: #{cma_forward.3} parent=5 // pred_check_branch
      %253 = sbr.rel (%p250) target = $region12
    $region11: #{cma_forward.3} parent=5 // pred_region
      %s254 = ssub.s32 %s15, 1
      // Predicated region
      $region13: #{cma_forward.3} parent=11 // pred_check
        %p255 = pneg %p36
      $region14: #{cma_forward.3} parent=11 // pred_check_branch
        %257 = sbr.rel (%p255) target = $region16
      $region15: #{cma_forward.3} parent=11 // pred_region
        _
      $region16: #{cma_forward.3} parent=11 // pred_fallthru
        _
      // Predicated region
      $region17: #{cma_forward.3} parent=11 // pred_check
        %p258 = pneg %p57
      $region18: #{cma_forward.3} parent=11 // pred_check_branch
        %260 = sbr.rel (%p258) target = $region20
      $region19: #{cma_forward.3} parent=11 // pred_region
        _
      $region20: #{cma_forward.3} parent=11 // pred_fallthru
        _
      // Predicated region
      $region21: #{cma_forward.3} parent=11 // pred_check
        %p261 = pneg %p130
      $region22: #{cma_forward.3} parent=11 // pred_check_branch
        %263 = sbr.rel (%p261) target = $region24
      $region23: #{cma_forward.3} parent=11 // pred_region
        _
      $region24: #{cma_forward.3} parent=11 // pred_fallthru
        _
      // Predicated region
      $region25: #{cma_forward.3} parent=11 // pred_check
        %p264 = pneg %p151
      $region26: #{cma_forward.3} parent=11 // pred_check_branch
        %266 = sbr.rel (%p264) target = $region28
      $region27: #{cma_forward.3} parent=11 // pred_region
        _
      $region28: #{cma_forward.3} parent=11 // pred_fallthru
        _
      // Predicated region
      $region29: #{cma_forward.3} parent=11 // pred_check
        %p267 = pneg %p172
      $region30: #{cma_forward.3} parent=11 // pred_check_branch
        %269 = sbr.rel (%p267) target = $region32
      $region31: #{cma_forward.3} parent=11 // pred_region
        _
      $region32: #{cma_forward.3} parent=11 // pred_fallthru
        _
      // Predicated region
      $region33: #{cma_forward.3} parent=11 // pred_check
        %p270 = pneg %p193
      $region34: #{cma_forward.3} parent=11 // pred_check_branch
        %272 = sbr.rel (%p270) target = $region36
      $region35: #{cma_forward.3} parent=11 // pred_region
        _
      $region36: #{cma_forward.3} parent=11 // pred_fallthru
        _
      // Predicated region
      $region37: #{cma_forward.3} parent=11 // pred_check
        %p273 = pneg %p214
      $region38: #{cma_forward.3} parent=11 // pred_check_branch
        %275 = sbr.rel (%p273) target = $region40
      $region39: #{cma_forward.3} parent=11 // pred_region
        _
      $region40: #{cma_forward.3} parent=11 // pred_fallthru
        _
    $region12: #{cma_forward.3} parent=5 // pred_fallthru
      _
    %p276 = scmp.lt.s32.totalorder %s15, 2
    // Predicated region
    $region41: #{cma_forward.3} parent=5 // pred_check
      %p277 = pneg %p276
    $region42: #{cma_forward.3} parent=5 // pred_check_branch
      %279 = sbr.rel (%p277) target = $region44
    $region43: #{cma_forward.3} parent=5 // pred_region
      // Predicated region
      $region45: #{cma_forward.3} parent=43 // pred_check
        %p280 = pneg %p77
      $region46: #{cma_forward.3} parent=43 // pred_check_branch
        %282 = sbr.rel (%p280) target = $region48
      $region47: #{cma_forward.3} parent=43 // pred_region
        %p283 = scmp.lt.s32.totalorder %s15, 1
        %s284 = scalar_select %p283, %s15, 1
        %s285 = smul.addr %s284, 2
        %s286 = smul.addr %s285, 4
        %s287 = scalar_lea.vmem %s2, %s286
      $region48: #{cma_forward.3} parent=43 // pred_fallthru
        _
      // Predicated region
      $region49: #{cma_forward.3} parent=43 // pred_check
        %p288 = pneg %p103
      $region50: #{cma_forward.3} parent=43 // pred_check_branch
        %290 = sbr.rel (%p288) target = $region52
      $region51: #{cma_forward.3} parent=43 // pred_region
        %p291 = scmp.lt.s32.totalorder %s15, 1
        %s292 = scalar_select %p291, %s15, 1
        %s293 = smul.addr %s292, 4
        %s294 = smul.addr %s293, 8
        %s295 = scalar_lea.vmem %s3, %s294
      $region52: #{cma_forward.3} parent=43 // pred_fallthru
        _
    $region44: #{cma_forward.3} parent=5 // pred_fallthru
      _
    %p296 = scmp.le.s32.totalorder 1, %s15
    %p297 = scmp.lt.s32.totalorder %s15, 3
    %p298 = pnand %p296, %p297
    %p299 = pneg %p298
    // Predicated region
    $region53: #{cma_forward.3} parent=5 // pred_check
      _
    $region54: #{cma_forward.3} parent=5 // pred_check_branch
      %301 = sbr.rel (%p298) target = $region56
    $region55: #{cma_forward.3} parent=5 // pred_region
      %s302 = ssub.s32 %s15, 1
      %p303 = pneg %p36
      %p304 = pneg %p33
      %p305 = pneg %p57
      %p306 = pneg %p54
      %p307 = scmp.lt.s32.totalorder %s20, 1
      %s308 = scalar_select %p307, %s20, 1
      %s309 = smul.addr %s308, 2
      %s310 = smul.addr %s309, 4
      %s311 = scalar_lea.vmem %s2, %s310
      %p312 = pneg %p83
      %p313 = pneg %p80
      %p314 = scmp.lt.s32.totalorder %s20, 1
      %s315 = scalar_select %p314, %s20, 1
      %s316 = smul.addr %s315, 4
      %s317 = smul.addr %s316, 8
      %s318 = scalar_lea.vmem %s3, %s317
      %p319 = pneg %p109
      %p320 = pneg %p106
      %p321 = pneg %p130
      %p322 = pneg %p127
      %p323 = pneg %p151
      %p324 = pneg %p148
      %p325 = pneg %p172
      %p326 = pneg %p169
      %p327 = pneg %p193
      %p328 = pneg %p190
      %p329 = pneg %p214
      %p330 = pneg %p211
      %p331 = pneg %p240
      %p332 = pneg %p237
      %p333 = scmp.lt.s32.totalorder %s20, 1
      %s334 = scalar_select %p333, %s20, 1
      %s335 = smul.addr %s334, 4
      %s336 = smul.addr %s335, 8
      %s337 = scalar_lea.vmem %s9, %s336
      %p338 = scmp.lt.s32.totalorder %s20, 1
      %s339 = scalar_select %p338, %s20, 1
      %s340 = smul.addr %s339, 2
      %s341 = smul.addr %s340, 4
      %s342 = scalar_lea.vmem %s2, %s341
      %p343 = scmp.lt.s32.totalorder %s20, 1
      %s344 = scalar_select %p343, %s20, 1
      %s345 = smul.addr %s344, 4
      %s346 = smul.addr %s345, 8
      %s347 = scalar_lea.vmem %s3, %s346
      %p348 = scmp.lt.s32.totalorder %s20, 1
      %s349 = scalar_select %p348, %s20, 1
      %s350 = smul.addr %s349, 4
      %s351 = smul.addr %s350, 8
      %s352 = scalar_lea.vmem %s9, %s351
      %v354 = vld [vmem:[%s4] sm:$0xf]
      %v355 = vunpack.c.l.bf16 %v354
      %v356 = vld [vmem:[%s7] sm:$0xf]
      %v357 = vld [vmem:[%s7 + $0x4] sm:$0xf]
      %v358 = vunpack.c.l.bf16 %v356
      %v359 = vunpack.c.l.bf16 %v357
      %v360 = vld [vmem:[%s0] sm:$0xff]
      %v361 = vld [vmem:[%s0 + $0x8] sm:$0xff]
      %vm362 = vcmask 7168
      %v363 = vsel %vm362, %v360, 0.0
      %v364 = vsel %vm362, %v361, 0.0
      %v365 = vadd.f32 %v363, %v364
      %v366 = vld [vmem:[%s1] sm:$0xff]
      %v367 = vld [vmem:[%s1 + $0x8] sm:$0xff]
      %vm368 = vcmask 64512
      %v369 = vsel %vm368, %v366, 0.0
      %v370 = vsel %vm368, %v367, 0.0
      %v371 = vadd.f32 %v369, %v370
      %v373 = vsel %vm368, %v355, 0
      %375 = vmatprep.subr.mxu0 0.0
      %376 = vmatpush1.msra.mxu0 %v365
      %377 = vmatprep.subr.mxu0 0.0
      %378 = vmatpush1.msra.mxu0 0.0
      %379 = vmatprep.subr.mxu0 0.0
      %380 = vmatpush1.msra.mxu0 0.0
      %381 = vmatprep.subr.mxu0 0.0
      %382 = vmatpush1.msra.mxu0 0.0
      %383 = vmatprep.subr.mxu0 0.0
      %384 = vmatpush1.msra.mxu0 0.0
      %385 = vmatprep.subr.mxu0 0.0
      %386 = vmatpush1.msra.mxu0 0.0
      %387 = vmatprep.subr.mxu0 0.0
      %388 = vmatpush1.msra.mxu0 0.0
      %389 = vmatprep.subr.mxu0 0.0
      %390 = vmatpush1.msra.mxu0 0.0
      %391 = vmatprep.subr.mxu0 0.0
      %392 = vmatpush1.msra.mxu0 0.0
      %393 = vmatprep.subr.mxu0 0.0
      %394 = vmatpush1.msra.mxu0 0.0
      %395 = vmatprep.subr.mxu0 0.0
      %396 = vmatpush1.msra.mxu0 0.0
      %397 = vmatprep.subr.mxu0 0.0
      %398 = vmatpush1.msra.mxu0 0.0
      %399 = vmatprep.subr.mxu0 0.0
      %400 = vmatpush1.msra.mxu0 0.0
      %401 = vmatprep.subr.mxu0 0.0
      %402 = vmatpush1.msra.mxu0 0.0
      %403 = vmatprep.subr.mxu0 0.0
      %404 = vmatpush1.msra.mxu0 0.0
      %405 = vmatprep.subr.mxu0 0.0
      %406 = vmatpush1.msra.mxu0 0.0
      %407 = vmatprep.subr.mxu0 0.0
      %408 = vmatpush1.msra.mxu0 0.0
      %409 = vmatprep.subr.mxu0 0.0
      %410 = vmatpush1.msra.mxu0 0.0
      %411 = vmatprep.subr.mxu0 0.0
      %412 = vmatpush1.msra.mxu0 0.0
      %413 = vmatprep.subr.mxu0 0.0
      %414 = vmatpush1.msra.mxu0 0.0
      %415 = vmatprep.subr.mxu0 0.0
      %416 = vmatpush1.msra.mxu0 0.0
      %417 = vmatprep.subr.mxu0 0.0
      %418 = vmatpush1.msra.mxu0 0.0
      %419 = vmatprep.subr.mxu0 0.0
      %420 = vmatpush1.msra.mxu0 0.0
      %421 = vmatprep.subr.mxu0 0.0
      %422 = vmatpush1.msra.mxu0 0.0
      %423 = vmatprep.subr.mxu0 0.0
      %424 = vmatpush1.msra.mxu0 0.0
      %425 = vmatprep.subr.mxu0 0.0
      %426 = vmatpush1.msra.mxu0 0.0
      %427 = vmatprep.subr.mxu0 0.0
      %428 = vmatpush1.msra.mxu0 0.0
      %429 = vmatprep.subr.mxu0 0.0
      %430 = vmatpush1.msra.mxu0 0.0
      %431 = vmatprep.subr.mxu0 0.0
      %432 = vmatpush1.msra.mxu0 0.0
      %433 = vmatprep.subr.mxu0 0.0
      %434 = vmatpush1.msra.mxu0 0.0
      %435 = vmatprep.subr.mxu0 0.0
      %436 = vmatpush1.msra.mxu0 0.0
      %437 = vmatprep.subr.mxu0 0.0
      %438 = vmatpush1.msra.mxu0 0.0
      %439 = vmatprep.mubr.f32.mxu0 0.0
      %440 = vmatmul.mubr.f32.gmra.mrb[0].mxu0 %v373
      %v441 = vpop.f32.mrb[0].mxu0
      %v442 = vadd.f32 0.0, %v441
      %v443 = vpop.f32.mrb[0].mxu0
      %444 = vdwg.mxu0
      %v445 = vmul.f32 %v442, 0.001953125
      %446 = vmatprep.subr.mxu0 0.0
      %447 = vmatpush1.msra.mxu0 %v371
      %448 = vmatprep.subr.mxu0 0.0
      %449 = vmatpush1.msra.mxu0 0.0
      %450 = vmatprep.subr.mxu0 0.0
      %451 = vmatpush1.msra.mxu0 0.0
      %452 = vmatprep.subr.mxu0 0.0
      %453 = vmatpush1.msra.mxu0 0.0
      %454 = vmatprep.subr.mxu0 0.0
      %455 = vmatpush1.msra.mxu0 0.0
      %456 = vmatprep.subr.mxu0 0.0
      %457 = vmatpush1.msra.mxu0 0.0
      %458 = vmatprep.subr.mxu0 0.0
      %459 = vmatpush1.msra.mxu0 0.0
      %460 = vmatprep.subr.mxu0 0.0
      %461 = vmatpush1.msra.mxu0 0.0
      %462 = vmatprep.subr.mxu0 0.0
      %463 = vmatpush1.msra.mxu0 0.0
      %464 = vmatprep.subr.mxu0 0.0
      %465 = vmatpush1.msra.mxu0 0.0
      %466 = vmatprep.subr.mxu0 0.0
      %467 = vmatpush1.msra.mxu0 0.0
      %468 = vmatprep.subr.mxu0 0.0
      %469 = vmatpush1.msra.mxu0 0.0
      %470 = vmatprep.subr.mxu0 0.0
      %471 = vmatpush1.msra.mxu0 0.0
      %472 = vmatprep.subr.mxu0 0.0
      %473 = vmatpush1.msra.mxu0 0.0
      %474 = vmatprep.subr.mxu0 0.0
      %475 = vmatpush1.msra.mxu0 0.0
      %476 = vmatprep.subr.mxu0 0.0
      %477 = vmatpush1.msra.mxu0 0.0
      %478 = vmatprep.subr.mxu0 0.0
      %479 = vmatpush1.msra.mxu0 0.0
      %480 = vmatprep.subr.mxu0 0.0
      %481 = vmatpush1.msra.mxu0 0.0
      %482 = vmatprep.subr.mxu0 0.0
      %483 = vmatpush1.msra.mxu0 0.0
      %484 = vmatprep.subr.mxu0 0.0
      %485 = vmatpush1.msra.mxu0 0.0
      %486 = vmatprep.subr.mxu0 0.0
      %487 = vmatpush1.msra.mxu0 0.0
      %488 = vmatprep.subr.mxu0 0.0
      %489 = vmatpush1.msra.mxu0 0.0
      %490 = vmatprep.subr.mxu0 0.0
      %491 = vmatpush1.msra.mxu0 0.0
      %492 = vmatprep.subr.mxu0 0.0
      %493 = vmatpush1.msra.mxu0 0.0
      %494 = vmatprep.subr.mxu0 0.0
      %495 = vmatpush1.msra.mxu0 0.0
      %496 = vmatprep.subr.mxu0 0.0
      %497 = vmatpush1.msra.mxu0 0.0
      %498 = vmatprep.subr.mxu0 0.0
      %499 = vmatpush1.msra.mxu0 0.0
      %500 = vmatprep.subr.mxu0 0.0
      %501 = vmatpush1.msra.mxu0 0.0
      %502 = vmatprep.subr.mxu0 0.0
      %503 = vmatpush1.msra.mxu0 0.0
      %504 = vmatprep.subr.mxu0 0.0
      %505 = vmatpush1.msra.mxu0 0.0
      %506 = vmatprep.subr.mxu0 0.0
      %507 = vmatpush1.msra.mxu0 0.0
      %508 = vmatprep.subr.mxu0 0.0
      %509 = vmatpush1.msra.mxu0 0.0
      %510 = vmatprep.mubr.f32.mxu0 0.0
      %511 = vmatmul.mubr.f32.gmra.mrb[0].mxu0 %v373
      %v512 = vpop.f32.mrb[0].mxu0
      %v513 = vadd.f32 0.0, %v512
      %v514 = vpop.f32.mrb[0].mxu0
      %515 = vdwg.mxu0
      %v516 = vmul.f32 %v513, %v355
      %v517 = vsel %vm368, %v516, 0.0
      %518 = vadd.xlane.f32.xlu0 %v517
      %v519 = vpop.xlane.xlu0 %518
      %v520 = vmul.f32 %v519, 0.001953125
      %v521 = vmul.f32 %v445, %v445
      %v522 = vsub.f32 %v520, %v521
      %v523 = vld [vmem:[%s5] sm:$0xff]
      %v524 = vadd.f32 %v522, 1e-05
      %v525 = vrsqrt.pop %v524
      %v526 = vmul.f32 %v523, %v525
      %v527 = vld [vmem:[%s6] sm:$0xff]
      %v528 = vmul.f32 %v445, %v526
      %v529 = vsub.f32 %v527, %v528
      %531 = vset.pattern.permute.xlu0 0
      %532 = vperm.xlu0 %531, %v526
      %v533 = vpop.permute.xlu0 %532
      %v535 = vmul.f32 %v355, %v533
      %v537 = vsel %vm368, %v358, 0
      %v540 = vsel %vm368, %v359, 0
      %542 = vmatprep.subr.mxu0 0.0
      %543 = vmatpush1.msra.mxu0 %v535
      %544 = vmatprep.subr.mxu0 0.0
      %545 = vmatpush1.msra.mxu0 0.0
      %546 = vmatprep.subr.mxu0 0.0
      %547 = vmatpush1.msra.mxu0 0.0
      %548 = vmatprep.subr.mxu0 0.0
      %549 = vmatpush1.msra.mxu0 0.0
      %550 = vmatprep.subr.mxu0 0.0
      %551 = vmatpush1.msra.mxu0 0.0
      %552 = vmatprep.subr.mxu0 0.0
      %553 = vmatpush1.msra.mxu0 0.0
      %554 = vmatprep.subr.mxu0 0.0
      %555 = vmatpush1.msra.mxu0 0.0
      %556 = vmatprep.subr.mxu0 0.0
      %557 = vmatpush1.msra.mxu0 0.0
      %558 = vmatprep.subr.mxu0 0.0
      %559 = vmatpush1.msra.mxu0 0.0
      %560 = vmatprep.subr.mxu0 0.0
      %561 = vmatpush1.msra.mxu0 0.0
      %562 = vmatprep.subr.mxu0 0.0
      %563 = vmatpush1.msra.mxu0 0.0
      %564 = vmatprep.subr.mxu0 0.0
      %565 = vmatpush1.msra.mxu0 0.0
      %566 = vmatprep.subr.mxu0 0.0
      %567 = vmatpush1.msra.mxu0 0.0
      %568 = vmatprep.subr.mxu0 0.0
      %569 = vmatpush1.msra.mxu0 0.0
      %570 = vmatprep.subr.mxu0 0.0
      %571 = vmatpush1.msra.mxu0 0.0
      %572 = vmatprep.subr.mxu0 0.0
      %573 = vmatpush1.msra.mxu0 0.0
      %574 = vmatprep.subr.mxu0 0.0
      %575 = vmatpush1.msra.mxu0 0.0
      %576 = vmatprep.subr.mxu0 0.0
      %577 = vmatpush1.msra.mxu0 0.0
      %578 = vmatprep.subr.mxu0 0.0
      %579 = vmatpush1.msra.mxu0 0.0
      %580 = vmatprep.subr.mxu0 0.0
      %581 = vmatpush1.msra.mxu0 0.0
      %582 = vmatprep.subr.mxu0 0.0
      %583 = vmatpush1.msra.mxu0 0.0
      %584 = vmatprep.subr.mxu0 0.0
      %585 = vmatpush1.msra.mxu0 0.0
      %586 = vmatprep.subr.mxu0 0.0
      %587 = vmatpush1.msra.mxu0 0.0
      %588 = vmatprep.subr.mxu0 0.0
      %589 = vmatpush1.msra.mxu0 0.0
      %590 = vmatprep.subr.mxu0 0.0
      %591 = vmatpush1.msra.mxu0 0.0
      %592 = vmatprep.subr.mxu0 0.0
      %593 = vmatpush1.msra.mxu0 0.0
      %594 = vmatprep.subr.mxu0 0.0
      %595 = vmatpush1.msra.mxu0 0.0
      %596 = vmatprep.subr.mxu0 0.0
      %597 = vmatpush1.msra.mxu0 0.0
      %598 = vmatprep.subr.mxu0 0.0
      %599 = vmatpush1.msra.mxu0 0.0
      %600 = vmatprep.subr.mxu0 0.0
      %601 = vmatpush1.msra.mxu0 0.0
      %602 = vmatprep.subr.mxu0 0.0
      %603 = vmatpush1.msra.mxu0 0.0
      %604 = vmatprep.subr.mxu0 0.0
      %605 = vmatpush1.msra.mxu0 0.0
      %606 = vmatprep.mubr.f32.mxu0 0.0
      %607 = vmatmul.mubr.f32.gmra.mrb[0].mxu0 %v537
      %v608 = vpop.f32.mrb[0].mxu0
      %v609 = vadd.f32 0.0, %v608
      %v610 = vpop.f32.mrb[0].mxu0
      %611 = vmatprep.mubr.f32.mxu0 0.0
      %612 = vmatmul.mubr.f32.gmra.mrb[0].mxu0 %v540
      %v613 = vpop.f32.mrb[0].mxu0
      %v614 = vadd.f32 0.0, %v613
      %v615 = vpop.f32.mrb[0].mxu0
      %616 = vdwg.mxu0
      %v617 = vld [vmem:[%s8] sm:$0xff]
      %v618 = vld [vmem:[%s8 + $0x8] sm:$0xff]
      %619 = vmatprep.subr.mxu0 0.0
      %620 = vmatpush1.msra.mxu0 %v529
      %621 = vmatprep.subr.mxu0 0.0
      %622 = vmatpush1.msra.mxu0 0.0
      %623 = vmatprep.subr.mxu0 0.0
      %624 = vmatpush1.msra.mxu0 0.0
      %625 = vmatprep.subr.mxu0 0.0
      %626 = vmatpush1.msra.mxu0 0.0
      %627 = vmatprep.subr.mxu0 0.0
      %628 = vmatpush1.msra.mxu0 0.0
      %629 = vmatprep.subr.mxu0 0.0
      %630 = vmatpush1.msra.mxu0 0.0
      %631 = vmatprep.subr.mxu0 0.0
      %632 = vmatpush1.msra.mxu0 0.0
      %633 = vmatprep.subr.mxu0 0.0
      %634 = vmatpush1.msra.mxu0 0.0
      %635 = vmatprep.subr.mxu0 0.0
      %636 = vmatpush1.msra.mxu0 0.0
      %637 = vmatprep.subr.mxu0 0.0
      %638 = vmatpush1.msra.mxu0 0.0
      %639 = vmatprep.subr.mxu0 0.0
      %640 = vmatpush1.msra.mxu0 0.0
      %641 = vmatprep.subr.mxu0 0.0
      %642 = vmatpush1.msra.mxu0 0.0
      %643 = vmatprep.subr.mxu0 0.0
      %644 = vmatpush1.msra.mxu0 0.0
      %645 = vmatprep.subr.mxu0 0.0
      %646 = vmatpush1.msra.mxu0 0.0
      %647 = vmatprep.subr.mxu0 0.0
      %648 = vmatpush1.msra.mxu0 0.0
      %649 = vmatprep.subr.mxu0 0.0
      %650 = vmatpush1.msra.mxu0 0.0
      %651 = vmatprep.subr.mxu0 0.0
      %652 = vmatpush1.msra.mxu0 0.0
      %653 = vmatprep.subr.mxu0 0.0
      %654 = vmatpush1.msra.mxu0 0.0
      %655 = vmatprep.subr.mxu0 0.0
      %656 = vmatpush1.msra.mxu0 0.0
      %657 = vmatprep.subr.mxu0 0.0
      %658 = vmatpush1.msra.mxu0 0.0
      %659 = vmatprep.subr.mxu0 0.0
      %660 = vmatpush1.msra.mxu0 0.0
      %661 = vmatprep.subr.mxu0 0.0
      %662 = vmatpush1.msra.mxu0 0.0
      %663 = vmatprep.subr.mxu0 0.0
      %664 = vmatpush1.msra.mxu0 0.0
      %665 = vmatprep.subr.mxu0 0.0
      %666 = vmatpush1.msra.mxu0 0.0
      %667 = vmatprep.subr.mxu0 0.0
      %668 = vmatpush1.msra.mxu0 0.0
      %669 = vmatprep.subr.mxu0 0.0
      %670 = vmatpush1.msra.mxu0 0.0
      %671 = vmatprep.subr.mxu0 0.0
      %672 = vmatpush1.msra.mxu0 0.0
      %673 = vmatprep.subr.mxu0 0.0
      %674 = vmatpush1.msra.mxu0 0.0
      %675 = vmatprep.subr.mxu0 0.0
      %676 = vmatpush1.msra.mxu0 0.0
      %677 = vmatprep.subr.mxu0 0.0
      %678 = vmatpush1.msra.mxu0 0.0
      %679 = vmatprep.subr.mxu0 0.0
      %680 = vmatpush1.msra.mxu0 0.0
      %681 = vmatprep.subr.mxu0 0.0
      %682 = vmatpush1.msra.mxu0 0.0
      %683 = vmatprep.mubr.f32.mxu0 0.0
      %684 = vmatmul.mubr.f32.gmra.mrb[0].mxu0 %v537
      %v685 = vpop.f32.mrb[0].mxu0
      %v686 = vadd.f32 %v617, %v685
      %v687 = vpop.f32.mrb[0].mxu0
      %688 = vmatprep.mubr.f32.mxu0 0.0
      %689 = vmatmul.mubr.f32.gmra.mrb[0].mxu0 %v540
      %v690 = vpop.f32.mrb[0].mxu0
      %v691 = vadd.f32 %v618, %v690
      %v692 = vpop.f32.mrb[0].mxu0
      %693 = vdwg.mxu0
      %v694 = vpack.c.bf16 %v614, %v609
      %v695 = vld [vmem:[%s342] sm:$0xff]
      %697 = vset.pattern.permute.xlu0 0
      %698 = vperm.xlu0 %697, %v686
      %v699 = vpop.permute.xlu0 %698
      %702 = vset.pattern.permute.xlu0 0
      %703 = vperm.xlu0 %702, %v691
      %v704 = vpop.permute.xlu0 %703
      %v707 = vunpack.c.l.b16 %v695
      %v708 = vunpack.c.h.b16 %v695
      %v709 = vpack.c.b16 %v707, %v707
      %v710 = vpack.c.b16 %v708, %v708
      %v712 = vsel %vm368, %v694, 0
      %vm714 = vcmask 1043456
      %v716 = vsel %vm714, %v709, 0
      %v719 = vsel %vm714, %v710, 0
      %721 = vmatprep.subr.bf16.mxu0 %v719
      %722 = vmatpush1.bf16.msra.mxu0 %v716
      %723 = vmatprep.subr.bf16.mxu0 0
      %724 = vmatpush1.bf16.msra.mxu0 0
      %725 = vmatprep.subr.bf16.mxu0 0
      %726 = vmatpush1.bf16.msra.mxu0 0
      %727 = vmatprep.subr.bf16.mxu0 0
      %728 = vmatpush1.bf16.msra.mxu0 0
      %729 = vmatprep.subr.bf16.mxu0 0
      %730 = vmatpush1.bf16.msra.mxu0 0
      %731 = vmatprep.subr.bf16.mxu0 0
      %732 = vmatpush1.bf16.msra.mxu0 0
      %733 = vmatprep.subr.bf16.mxu0 0
      %734 = vmatpush1.bf16.msra.mxu0 0
      %735 = vmatprep.subr.bf16.mxu0 0
      %736 = vmatpush1.bf16.msra.mxu0 0
      %737 = vmatprep.subr.bf16.mxu0 0
      %738 = vmatpush1.bf16.msra.mxu0 0
      %739 = vmatprep.subr.bf16.mxu0 0
      %740 = vmatpush1.bf16.msra.mxu0 0
      %741 = vmatprep.subr.bf16.mxu0 0
      %742 = vmatpush1.bf16.msra.mxu0 0
      %743 = vmatprep.subr.bf16.mxu0 0
      %744 = vmatpush1.bf16.msra.mxu0 0
      %745 = vmatprep.subr.bf16.mxu0 0
      %746 = vmatpush1.bf16.msra.mxu0 0
      %747 = vmatprep.subr.bf16.mxu0 0
      %748 = vmatpush1.bf16.msra.mxu0 0
      %749 = vmatprep.subr.bf16.mxu0 0
      %750 = vmatpush1.bf16.msra.mxu0 0
      %751 = vmatprep.subr.bf16.mxu0 0
      %752 = vmatpush1.bf16.msra.mxu0 0
      %753 = vmatprep.mubr.bf16.mxu0 0
      %754 = vmatmul.mubr.bf16.gmra.mrb[0].mxu0 %v712
      %v755 = vpop.f32.mrb[0].mxu0
      %v756 = vadd.f32 %v699, %v755
      %v757 = vpop.f32.mrb[0].mxu0
      %v758 = vadd.f32 %v699, %v757
      %v759 = vpop.f32.mrb[0].mxu0
      %v760 = vadd.f32 %v704, %v759
      %v761 = vpop.f32.mrb[0].mxu0
      %v762 = vadd.f32 %v704, %v761
      %763 = vdwg.mxu0
      %v764 = vld [vmem:[%s347] sm:$0xff]
      %v765 = vld [vmem:[%s347 + $0x8] sm:$0xff]
      %v766 = vld [vmem:[%s347 + $0x10] sm:$0xff]
      %v767 = vld [vmem:[%s347 + $0x18] sm:$0xff]
      %v768 = vadd.f32 %v756, %v764
      %v769 = vadd.f32 %v758, %v765
      %v770 = vadd.f32 %v760, %v766
      %v771 = vadd.f32 %v762, %v767
      %v772 = vmax.f32 %v768, 0.0
      %v773 = vmax.f32 %v769, 0.0
      %v774 = vmax.f32 %v770, 0.0
      %v775 = vmax.f32 %v771, 0.0
      %776 = vst [vmem:[%s352] sm:$0xff] %v772
      %777 = vst [vmem:[%s352 + $0x8] sm:$0xff] %v773
      %778 = vst [vmem:[%s352 + $0x10] sm:$0xff] %v774
      %779 = vst [vmem:[%s352 + $0x18] sm:$0xff] %v775
      %p780 = scmp.lt.s32.totalorder %s20, 1
      %s781 = scalar_select %p780, %s20, 1
      %s782 = smul.addr %s781, 4
      %s783 = smul.addr %s782, 8
      %s784 = scalar_lea.vmem %s9, %s783
      // Predicated region
      $region57: #{cma_forward.3} parent=55 // pred_check
        %p785 = pneg %p237
      $region58: #{cma_forward.3} parent=55 // pred_check_branch
        %787 = sbr.rel (%p785) target = $region60
      $region59: #{cma_forward.3} parent=55 // pred_region
        _
      $region60: #{cma_forward.3} parent=55 // pred_fallthru
        _
    $region56: #{cma_forward.3} parent=5 // pred_fallthru
      _
    %p788 = scmp.le.s32.totalorder 2, %s15
    // Predicated region
    $region61: #{cma_forward.3} parent=5 // pred_check
      %p789 = pneg %p788
    $region62: #{cma_forward.3} parent=5 // pred_check_branch
      %791 = sbr.rel (%p789) target = $region64
    $region63: #{cma_forward.3} parent=5 // pred_region
      %s792 = ssub.s32 %s15, 2
      // Predicated region
      $region65: #{cma_forward.3} parent=63 // pred_check
        %p793 = pneg %p243
      $region66: #{cma_forward.3} parent=63 // pred_check_branch
        %795 = sbr.rel (%p793) target = $region68
      $region67: #{cma_forward.3} parent=63 // pred_region
        %p796 = scmp.lt.s32.totalorder %s21, 1
        %s797 = scalar_select %p796, %s21, 1
        %s798 = smul.addr %s797, 4
        %s799 = smul.addr %s798, 8
        %s800 = scalar_lea.vmem %s9, %s799
      $region68: #{cma_forward.3} parent=63 // pred_fallthru
        _
    $region64: #{cma_forward.3} parent=5 // pred_fallthru
      _
  $region6: #{cma_forward.3} parent=0 // loop_footer
    %s19 = sadd.s32 1, %s15
  $region7: #{cma_forward.3} parent=0 // loop_footer_branch
    %14 = sbr.rel target = $region3
  $region8: #{cma_forward.3} parent=0 // loop_exit
    _

// kernel: cma_forward.2
$region0: #{cma_forward.2}
  #allocation0 [shape = 'u32[]', space=smem, size = 0x4, offset = 0x4, fixed_abs, tag = 'smem constant byte address 0x4 - core index']
  #allocation1 [shape = 'u32[144,128]{1,0:T(1,128)}', space=vmem, size = 0x12000, scoped, tag = 'internal scratch']
  %s0 = inlined_call_operand.vmem [shape: f32[2,16,256], index: 0, kind: input, shape index: {}]
  %s1 = inlined_call_operand.vmem [shape: bf16[24,16], index: 1, kind: input, shape index: {}]
  %s2 = inlined_call_operand.vmem [shape: f32[24,1], index: 2, kind: input, shape index: {}]
  %s3 = inlined_call_operand.vmem [shape: bf16[2,8,256], index: 3, kind: output, shape index: {0}]
  %s4 = inlined_call_operand.vmem [shape: f32[2,8,1], index: 4, kind: output, shape index: {1}]
  %s5 = inlined_call_operand.vmem [shape: f32[2,8,8], index: 5, kind: output, shape index: {2}]
  %6 = xla_tuple %s3, %s4, %s5
  %s7 = sld [smem:[#allocation0]]
  $region61: #{cma_forward.2} parent=0
    _
  %s9 = ssub.s32 1, %s7
  %s10 = scalar_select 0, %s9, %s7
  loop: start=0, step=1, limit=4
  $region2: #{cma_forward.2} parent=0 // loop_pre_header
    _
  $region3: #{cma_forward.2} parent=0 // loop_header
    %s12 = sphi 0, %s16
    %p13 = scmp.ge.s32.totalorder %s12, 4
    %s22 = sphi 0, %s24
    %s25 = sphi 0, %s22
    %s26 = sphi 0, %s25
    %s42 = sphi 0, %s26
    %s46 = sphi 0, %s46
    %s48 = sphi 0, %s46
    %s49 = sphi 0, %s48
    %s63 = sphi 0, %s49
    %s67 = sphi 0, %s67
    %s69 = sphi 0, %s67
    %s70 = sphi 0, %s69
    %s84 = sphi 0, %s70
    %s90 = sphi 0, %s92
    %s93 = sphi 0, %s90
    %s94 = sphi 0, %s93
    %s110 = sphi 0, %s94
    %s116 = sphi 0, %s118
    %s119 = sphi 0, %s116
    %s120 = sphi 0, %s119
    %s136 = sphi 0, %s120
    %s142 = sphi 0, %s144
    %s145 = sphi 0, %s142
    %s146 = sphi 0, %s145
    %s162 = sphi 0, %s146
  $region4: #{cma_forward.2} parent=0 // loop_header_branch
    %15 = sbr.rel (%p13) target = $region8
  $region5: #{cma_forward.2} parent=0 // loop_body
    %s17 = ssub.s32 %s12, 1
    %s18 = ssub.s32 %s12, 2
    %s19 = sadd.s32 %s12, 1
    %s20 = ssub.s32 %s12, %s19
    %p21 = scmp.eq.s32.totalorder %s20, 0
    %s23 = sadd.s32 %s22, 1
    %s24 = scalar_select %p21, %s22, %s23
    %p27 = pneg %p21
    %p28 = scmp.eq.s32.totalorder %s12, 1
    %p29 = por %p27, %p28
    %p30 = scmp.ne.s32.totalorder %s22, %s25
    %p31 = scmp.eq.s32.totalorder %s12, 0
    %p32 = por %p30, %p31
    %p33 = scmp.ne.s32.totalorder %s22, %s25
    %p34 = scmp.eq.s32.totalorder %s17, 1
    %p35 = por %p33, %p34
    %p36 = scmp.ne.s32.totalorder %s25, %s26
    %p37 = scmp.eq.s32.totalorder %s17, 0
    %p38 = por %p36, %p37
    %p39 = scmp.ne.s32.totalorder %s25, %s26
    %p40 = scmp.eq.s32.totalorder %s18, 1
    %p41 = por %p39, %p40
    %p43 = scmp.ne.s32.totalorder %s26, %s42
    %p44 = scmp.eq.s32.totalorder %s18, 0
    %p45 = por %p43, %p44
    %s47 = sadd.s32 %s46, 1
    %p50 = scmp.eq.s32.totalorder %s12, 1
    %p51 = scmp.ne.s32.totalorder %s46, %s48
    %p52 = scmp.eq.s32.totalorder %s12, 0
    %p53 = por %p51, %p52
    %p54 = scmp.ne.s32.totalorder %s46, %s48
    %p55 = scmp.eq.s32.totalorder %s17, 1
    %p56 = por %p54, %p55
    %p57 = scmp.ne.s32.totalorder %s48, %s49
    %p58 = scmp.eq.s32.totalorder %s17, 0
    %p59 = por %p57, %p58
    %p60 = scmp.ne.s32.totalorder %s48, %s49
    %p61 = scmp.eq.s32.totalorder %s18, 1
    %p62 = por %p60, %p61
    %p64 = scmp.ne.s32.totalorder %s49, %s63
    %p65 = scmp.eq.s32.totalorder %s18, 0
    %p66 = por %p64, %p65
    %s68 = sadd.s32 %s67, 1
    %p71 = scmp.eq.s32.totalorder %s12, 1
    %p72 = scmp.ne.s32.totalorder %s67, %s69
    %p73 = scmp.eq.s32.totalorder %s12, 0
    %p74 = por %p72, %p73
    %p75 = scmp.ne.s32.totalorder %s67, %s69
    %p76 = scmp.eq.s32.totalorder %s17, 1
    %p77 = por %p75, %p76
    %p78 = scmp.ne.s32.totalorder %s69, %s70
    %p79 = scmp.eq.s32.totalorder %s17, 0
    %p80 = por %p78, %p79
    %p81 = scmp.ne.s32.totalorder %s69, %s70
    %p82 = scmp.eq.s32.totalorder %s18, 1
    %p83 = por %p81, %p82
    %p85 = scmp.ne.s32.totalorder %s70, %s84
    %p86 = scmp.eq.s32.totalorder %s18, 0
    %p87 = por %p85, %p86
    %s88 = ssub.s32 %s12, %s19
    %p89 = scmp.eq.s32.totalorder %s88, 0
    %s91 = sadd.s32 %s90, 1
    %s92 = scalar_select %p89, %s90, %s91
    %p95 = pneg %p89
    %p96 = scmp.eq.s32.totalorder %s12, 1
    %p97 = por %p95, %p96
    %p98 = scmp.ne.s32.totalorder %s90, %s93
    %p99 = scmp.eq.s32.totalorder %s12, 0
    %p100 = por %p98, %p99
    %p101 = scmp.ne.s32.totalorder %s90, %s93
    %p102 = scmp.eq.s32.totalorder %s17, 1
    %p103 = por %p101, %p102
    %p104 = scmp.ne.s32.totalorder %s93, %s94
    %p105 = scmp.eq.s32.totalorder %s17, 0
    %p106 = por %p104, %p105
    %p107 = scmp.ne.s32.totalorder %s93, %s94
    %p108 = scmp.eq.s32.totalorder %s18, 1
    %p109 = por %p107, %p108
    %p111 = scmp.ne.s32.totalorder %s94, %s110
    %p112 = scmp.eq.s32.totalorder %s18, 0
    %p113 = por %p111, %p112
    %s114 = ssub.s32 %s12, %s19
    %p115 = scmp.eq.s32.totalorder %s114, 0
    %s117 = sadd.s32 %s116, 1
    %s118 = scalar_select %p115, %s116, %s117
    %p121 = pneg %p115
    %p122 = scmp.eq.s32.totalorder %s12, 1
    %p123 = por %p121, %p122
    %p124 = scmp.ne.s32.totalorder %s116, %s119
    %p125 = scmp.eq.s32.totalorder %s12, 0
    %p126 = por %p124, %p125
    %p127 = scmp.ne.s32.totalorder %s116, %s119
    %p128 = scmp.eq.s32.totalorder %s17, 1
    %p129 = por %p127, %p128
    %p130 = scmp.ne.s32.totalorder %s119, %s120
    %p131 = scmp.eq.s32.totalorder %s17, 0
    %p132 = por %p130, %p131
    %p133 = scmp.ne.s32.totalorder %s119, %s120
    %p134 = scmp.eq.s32.totalorder %s18, 1
    %p135 = por %p133, %p134
    %p137 = scmp.ne.s32.totalorder %s120, %s136
    %p138 = scmp.eq.s32.totalorder %s18, 0
    %p139 = por %p137, %p138
    %s140 = ssub.s32 %s12, %s19
    %p141 = scmp.eq.s32.totalorder %s140, 0
    %s143 = sadd.s32 %s142, 1
    %s144 = scalar_select %p141, %s142, %s143
    %p147 = pneg %p141
    %p148 = scmp.eq.s32.totalorder %s12, 1
    %p149 = por %p147, %p148
    %p150 = scmp.ne.s32.totalorder %s142, %s145
    %p151 = scmp.eq.s32.totalorder %s12, 0
    %p152 = por %p150, %p151
    %p153 = scmp.ne.s32.totalorder %s142, %s145
    %p154 = scmp.eq.s32.totalorder %s17, 1
    %p155 = por %p153, %p154
    %p156 = scmp.ne.s32.totalorder %s145, %s146
    %p157 = scmp.eq.s32.totalorder %s17, 0
    %p158 = por %p156, %p157
    %p159 = scmp.ne.s32.totalorder %s145, %s146
    %p160 = scmp.eq.s32.totalorder %s18, 1
    %p161 = por %p159, %p160
    %p163 = scmp.ne.s32.totalorder %s146, %s162
    %p164 = scmp.eq.s32.totalorder %s18, 0
    %p165 = por %p163, %p164
    %p166 = scmp.le.s32.totalorder 1, %s12
    %p167 = scmp.lt.s32.totalorder %s12, 3
    %p168 = pnand %p166, %p167
    %p169 = pneg %p168
    // Predicated region
    $region9: #{cma_forward.2} parent=5 // pred_check
      _
    $region10: #{cma_forward.2} parent=5 // pred_check_branch
      %171 = sbr.rel (%p168) target = $region12
    $region11: #{cma_forward.2} parent=5 // pred_region
      %s172 = ssub.s32 %s12, 1
      // Predicated region
      $region13: #{cma_forward.2} parent=11 // pred_check
        %p173 = pneg %p59
      $region14: #{cma_forward.2} parent=11 // pred_check_branch
        %175 = sbr.rel (%p173) target = $region16
      $region15: #{cma_forward.2} parent=11 // pred_region
        _
      $region16: #{cma_forward.2} parent=11 // pred_fallthru
        _
      // Predicated region
      $region17: #{cma_forward.2} parent=11 // pred_check
        %p176 = pneg %p80
      $region18: #{cma_forward.2} parent=11 // pred_check_branch
        %178 = sbr.rel (%p176) target = $region20
      $region19: #{cma_forward.2} parent=11 // pred_region
        _
      $region20: #{cma_forward.2} parent=11 // pred_fallthru
        _
    $region12: #{cma_forward.2} parent=5 // pred_fallthru
      _
    %p179 = scmp.lt.s32.totalorder %s12, 2
    // Predicated region
    $region21: #{cma_forward.2} parent=5 // pred_check
      %p180 = pneg %p179
    $region22: #{cma_forward.2} parent=5 // pred_check_branch
      %182 = sbr.rel (%p180) target = $region24
    $region23: #{cma_forward.2} parent=5 // pred_region
      // Predicated region
      $region25: #{cma_forward.2} parent=23 // pred_check
        %p183 = pneg %p32
      $region26: #{cma_forward.2} parent=23 // pred_check_branch
        %185 = sbr.rel (%p183) target = $region28
      $region27: #{cma_forward.2} parent=23 // pred_region
        %p186 = scmp.lt.s32.totalorder %s12, 1
        %s187 = scalar_select %p186, %s12, 1
        %s188 = smul.addr %s187, 4
        %s189 = smul.addr %s188, 8
        %s190 = scalar_lea.vmem %s0, %s189
      $region28: #{cma_forward.2} parent=23 // pred_fallthru
        _
    $region24: #{cma_forward.2} parent=5 // pred_fallthru
      _
    %p191 = scmp.le.s32.totalorder 1, %s12
    %p192 = scmp.lt.s32.totalorder %s12, 3
    %p193 = pnand %p191, %p192
    %p194 = pneg %p193
    // Predicated region
    $region29: #{cma_forward.2} parent=5 // pred_check
      _
    $region30: #{cma_forward.2} parent=5 // pred_check_branch
      %196 = sbr.rel (%p193) target = $region32
    $region31: #{cma_forward.2} parent=5 // pred_region
      %s197 = ssub.s32 %s12, 1
      %p198 = scmp.lt.s32.totalorder %s17, 1
      %s199 = scalar_select %p198, %s17, 1
      %s200 = smul.addr %s199, 4
      %s201 = smul.addr %s200, 8
      %s202 = scalar_lea.vmem %s0, %s201
      %p203 = pneg %p38
      %p204 = pneg %p35
      %p205 = pneg %p59
      %p206 = pneg %p56
      %p207 = pneg %p80
      %p208 = pneg %p77
      %p209 = pneg %p106
      %p210 = pneg %p103
      %p211 = scmp.lt.s32.totalorder %s17, 1
      %s212 = scalar_select %p211, %s17, 1
      %s213 = smul.addr %s212, 2
      %s214 = smul.addr %s213, 4
      %s215 = scalar_lea.vmem %s3, %s214
      %p216 = pneg %p132
      %p217 = pneg %p129
      %p218 = scmp.lt.s32.totalorder %s17, 1
      %s219 = scalar_select %p218, %s17, 1
      %s220 = smul.addr %s219, 8
      %s221 = scalar_lea.vmem %s4, %s220
      %p222 = pneg %p158
      %p223 = pneg %p155
      %p224 = scmp.lt.s32.totalorder %s17, 1
      %s225 = scalar_select %p224, %s17, 1
      %s226 = smul.addr %s225, 8
      %s227 = scalar_lea.vmem %s5, %s226
      %p228 = scmp.lt.s32.totalorder %s17, 1
      %s229 = scalar_select %p228, %s17, 1
      %s230 = smul.addr %s229, 4
      %s231 = smul.addr %s230, 8
      %s232 = scalar_lea.vmem %s0, %s231
      %p233 = scmp.lt.s32.totalorder %s17, 1
      %s234 = scalar_select %p233, %s17, 1
      %s235 = smul.addr %s234, 2
      %s236 = smul.addr %s235, 4
      %s237 = scalar_lea.vmem %s3, %s236
      %p238 = scmp.lt.s32.totalorder %s17, 1
      %s239 = scalar_select %p238, %s17, 1
      %s240 = smul.addr %s239, 8
      %s241 = scalar_lea.vmem %s4, %s240
      %p242 = scmp.lt.s32.totalorder %s17, 1
      %s243 = scalar_select %p242, %s17, 1
      %s244 = smul.addr %s243, 8
      %s245 = scalar_lea.vmem %s5, %s244
      %v247 = vld [vmem:[%s232] sm:$0xff]
      %v248 = vld [vmem:[%s232 + $0x8] sm:$0xff]
      %v249 = vld [vmem:[%s232 + $0x10] sm:$0xff]
      %v250 = vld [vmem:[%s232 + $0x18] sm:$0xff]
      %v251 = vpack.c.bf16 %v249, %v247
      %v252 = vpack.c.bf16 %v250, %v248
      %v253 = vld [vmem:[%s1] sm:$0xf]
      %v254 = vld [vmem:[%s1 + $0x4] sm:$0xf]
      %v255 = vld [vmem:[%s1 + $0x8] sm:$0xf]
      %v256 = vld [vmem:[%s2] sm:$0xff]
      %v257 = vld [vmem:[%s2 + $0x8] sm:$0xff]
      %v258 = vld [vmem:[%s2 + $0x10] sm:$0xff]
      %260 = vset.pattern.permute.xlu0 0
      %261 = vperm.xlu0 %260, %v256
      %v262 = vpop.permute.xlu0 %261
      %265 = vset.pattern.permute.xlu0 0
      %266 = vperm.xlu0 %265, %v257
      %v267 = vpop.permute.xlu0 %266
      %270 = vset.pattern.permute.xlu0 0
      %271 = vperm.xlu0 %270, %v258
      %v272 = vpop.permute.xlu0 %271
      %v277 = vunpack.c.l.b16 %v253
      %v278 = vunpack.c.l.b16 %v254
      %v279 = vunpack.c.l.b16 %v255
      %v280 = vpack.c.b16 %v278, %v277
      %v281 = vpack.c.b16 %v279, %v279
      %vm282 = vcmask 130048
      %v284 = vsel %vm282, %v280, 0
      %v287 = vsel %vm282, %v281, 0
      %289 = vmatprep.subr.bf16.mxu0 %v252
      %290 = vmatpush1.bf16.msra.mxu0 %v251
      %291 = vmatprep.subr.bf16.mxu0 0
      %292 = vmatpush1.bf16.msra.mxu0 0
      %293 = vmatprep.subr.bf16.mxu0 0
      %294 = vmatpush1.bf16.msra.mxu0 0
      %295 = vmatprep.subr.bf16.mxu0 0
      %296 = vmatpush1.bf16.msra.mxu0 0
      %297 = vmatprep.subr.bf16.mxu0 0
      %298 = vmatpush1.bf16.msra.mxu0 0
      %299 = vmatprep.subr.bf16.mxu0 0
      %300 = vmatpush1.bf16.msra.mxu0 0
      %301 = vmatprep.subr.bf16.mxu0 0
      %302 = vmatpush1.bf16.msra.mxu0 0
      %303 = vmatprep.subr.bf16.mxu0 0
      %304 = vmatpush1.bf16.msra.mxu0 0
      %305 = vmatprep.subr.bf16.mxu0 0
      %306 = vmatpush1.bf16.msra.mxu0 0
      %307 = vmatprep.subr.bf16.mxu0 0
      %308 = vmatpush1.bf16.msra.mxu0 0
      %309 = vmatprep.subr.bf16.mxu0 0
      %310 = vmatpush1.bf16.msra.mxu0 0
      %311 = vmatprep.subr.bf16.mxu0 0
      %312 = vmatpush1.bf16.msra.mxu0 0
      %313 = vmatprep.subr.bf16.mxu0 0
      %314 = vmatpush1.bf16.msra.mxu0 0
      %315 = vmatprep.subr.bf16.mxu0 0
      %316 = vmatpush1.bf16.msra.mxu0 0
      %317 = vmatprep.subr.bf16.mxu0 0
      %318 = vmatpush1.bf16.msra.mxu0 0
      %319 = vmatprep.subr.bf16.mxu0 0
      %320 = vmatpush1.bf16.msra.mxu0 0
      %321 = vmatprep.mubr.bf16.mxu0 0
      %322 = vmatmul.mubr.bf16.gmra.mrb[0].mxu0 %v284
      %v323 = vpop.f32.mrb[0].mxu0
      %v324 = vadd.f32 %v262, %v323
      %v325 = vpop.f32.mrb[0].mxu0
      %v326 = vadd.f32 %v262, %v325
      %v327 = vpop.f32.mrb[0].mxu0
      %v328 = vadd.f32 %v267, %v327
      %v329 = vpop.f32.mrb[0].mxu0
      %v330 = vadd.f32 %v267, %v329
      %331 = vmatprep.mubr.bf16.mxu0 0
      %332 = vmatmul.mubr.bf16.gmra.mrb[0].mxu0 %v287
      %v333 = vpop.f32.mrb[0].mxu0
      %v334 = vadd.f32 %v272, %v333
      %v335 = vpop.f32.mrb[0].mxu0
      %v336 = vadd.f32 %v272, %v335
      %v337 = vpop.f32.mrb[0].mxu0
      %v338 = vpop.f32.mrb[0].mxu0
      %339 = vdwg.mxu0
      %v340 = vpack.c.bf16 %v328, %v324
      %v341 = vpack.c.bf16 %v330, %v326
      %v342 = vpack.c.bf16 %v334, %v334
      %v343 = vpack.c.bf16 %v336, %v336
      %v346 = vrot.slane %v340, 4
      %v347 = vrot.slane %v341, 4
      %350 = vmatprep.subr.bf16.mxu0 %v347
      %351 = vmatpush1.bf16.xpose.msra.mxu0 %v346
      %352 = vmatprep.subr.bf16.mxu0 0
      %353 = vmatpush1.bf16.xpose.msra.mxu0 0
      %354 = vmatprep.subr.bf16.mxu0 0
      %355 = vmatpush1.bf16.xpose.msra.mxu0 0
      %356 = vmatprep.subr.bf16.mxu0 0
      %357 = vmatpush1.bf16.xpose.msra.mxu0 0
      %358 = vmatprep.subr.bf16.mxu0 0
      %359 = vmatpush1.bf16.xpose.msra.mxu0 0
      %360 = vmatprep.subr.bf16.mxu0 0
      %361 = vmatpush1.bf16.xpose.msra.mxu0 0
      %362 = vmatprep.subr.bf16.mxu0 0
      %363 = vmatpush1.bf16.xpose.msra.mxu0 0
      %364 = vmatprep.subr.bf16.mxu0 0
      %365 = vmatpush1.bf16.xpose.msra.mxu0 0
      %366 = vmatprep.subr.bf16.mxu0 0
      %367 = vmatpush1.bf16.xpose.msra.mxu0 0
      %368 = vmatprep.subr.bf16.mxu0 0
      %369 = vmatpush1.bf16.xpose.msra.mxu0 0
      %370 = vmatprep.subr.bf16.mxu0 0
      %371 = vmatpush1.bf16.xpose.msra.mxu0 0
      %372 = vmatprep.subr.bf16.mxu0 0
      %373 = vmatpush1.bf16.xpose.msra.mxu0 0
      %374 = vmatprep.subr.bf16.mxu0 0
      %375 = vmatpush1.bf16.xpose.msra.mxu0 0
      %376 = vmatprep.subr.bf16.mxu0 0
      %377 = vmatpush1.bf16.xpose.msra.mxu0 0
      %378 = vmatprep.subr.bf16.mxu0 0
      %379 = vmatpush1.bf16.xpose.msra.mxu0 0
      %380 = vmatprep.subr.bf16.mxu0 0
      %381 = vmatpush1.bf16.xpose.msra.mxu0 0
      %382 = vmatprep.mubr.bf16.mxu0 %v341
      %383 = vmatmul.mubr.bf16.gmra.mrb[0].mxu0 %v340
      %v384 = vpop.f32.mrb[0].mxu0
      %v385 = vadd.f32 0.0, %v384
      %v386 = vpop.f32.mrb[0].mxu0
      %v387 = vpop.f32.mrb[0].mxu0
      %v388 = vpop.f32.mrb[0].mxu0
      %389 = vdwg.mxu0
      %vm390 = vcmask 64512
      %v391 = vsel %vm390, %v385, -inf
      %392 = vmax.xlane.f32.xlu0 %v391
      %v393 = vpop.xlane.xlu0 %392
      %v394 = vsub.f32 %v385, %v393
      %v395 = vmul.f32 %v394, 1.442695
      %v396 = vpow.pop %v395
      %v397 = vsel %vm390, %v396, 0.0
      %398 = vadd.xlane.f32.xlu0 %v397
      %v399 = vpop.xlane.xlu0 %398
      %v400 = vrcp.pop %v399
      %v401 = vmul.f32 %v396, %v400
      %v402 = vpack.c.bf16 %v401, %v401
      %403 = vxpose.xlu0.c.b16.start [1/8] %v402, 128
      %404 = vxpose.xlu0.c.b16.cont [2/8] 0, 128
      %405 = vxpose.xlu0.c.b16.cont [3/8] 0, 128
      %406 = vxpose.xlu0.c.b16.cont [4/8] 0, 128
      %407 = vxpose.xlu0.c.b16.cont [5/8] 0, 128
      %408 = vxpose.xlu0.c.b16.cont [6/8] 0, 128
      %409 = vxpose.xlu0.c.b16.cont [7/8] 0, 128
      %410 = vxpose.xlu0.c.b16.end [8/8] 0, 128
      %v411 = vpop.trf.xlu0
      %v412 = vpop.trf.xlu0
      %v413 = vpop.trf.xlu0
      %v414 = vpop.trf.xlu0
      %v415 = vpop.trf.xlu0
      %v416 = vpop.trf.xlu0
      %v417 = vpop.trf.xlu0
      %v418 = vpop.trf.xlu0
      %v420 = vsel %vm390, %v411, 0
      %vm422 = vcmask 1043456
      %v424 = vsel %vm422, %v342, 0
      %v427 = vsel %vm422, %v343, 0
      %429 = vmatprep.subr.bf16.mxu0 %v427
      %430 = vmatpush1.bf16.msra.mxu0 %v424
      %431 = vmatprep.subr.bf16.mxu0 0
      %432 = vmatpush1.bf16.msra.mxu0 0
      %433 = vmatprep.subr.bf16.mxu0 0
      %434 = vmatpush1.bf16.msra.mxu0 0
      %435 = vmatprep.subr.bf16.mxu0 0
      %436 = vmatpush1.bf16.msra.mxu0 0
      %437 = vmatprep.subr.bf16.mxu0 0
      %438 = vmatpush1.bf16.msra.mxu0 0
      %439 = vmatprep.subr.bf16.mxu0 0
      %440 = vmatpush1.bf16.msra.mxu0 0
      %441 = vmatprep.subr.bf16.mxu0 0
      %442 = vmatpush1.bf16.msra.mxu0 0
      %443 = vmatprep.subr.bf16.mxu0 0
      %444 = vmatpush1.bf16.msra.mxu0 0
      %445 = vmatprep.subr.bf16.mxu0 0
      %446 = vmatpush1.bf16.msra.mxu0 0
      %447 = vmatprep.subr.bf16.mxu0 0
      %448 = vmatpush1.bf16.msra.mxu0 0
      %449 = vmatprep.subr.bf16.mxu0 0
      %450 = vmatpush1.bf16.msra.mxu0 0
      %451 = vmatprep.subr.bf16.mxu0 0
      %452 = vmatpush1.bf16.msra.mxu0 0
      %453 = vmatprep.subr.bf16.mxu0 0
      %454 = vmatpush1.bf16.msra.mxu0 0
      %455 = vmatprep.subr.bf16.mxu0 0
      %456 = vmatpush1.bf16.msra.mxu0 0
      %457 = vmatprep.subr.bf16.mxu0 0
      %458 = vmatpush1.bf16.msra.mxu0 0
      %459 = vmatprep.subr.bf16.mxu0 0
      %460 = vmatpush1.bf16.msra.mxu0 0
      %461 = vmatprep.mubr.bf16.mxu0 0
      %462 = vmatmul.mubr.bf16.gmra.mrb[0].mxu0 %v420
      %v463 = vpop.f32.mrb[0].mxu0
      %v464 = vadd.f32 0.0, %v463
      %v465 = vpop.f32.mrb[0].mxu0
      %v466 = vadd.f32 0.0, %v465
      %v467 = vpop.f32.mrb[0].mxu0
      %v468 = vpop.f32.mrb[0].mxu0
      %469 = vdwg.mxu0
      %v470 = vpack.c.bf16 %v464, %v464
      %v471 = vpack.c.bf16 %v466, %v466
      %v474 = vunpack.c.l.b16 %v470
      %v475 = vunpack.c.l.b16 %v471
      %v476 = vpack.c.b16 %v475, %v474
      %478 = vst [vmem:[%s237] sm:$0xff] %v476
      %v479 = vunpack.c.l.bf16 %v470
      %v480 = vunpack.c.l.bf16 %v471
      %v481 = vadd.f32 %v479, %v480
      %482 = vadd.xlane.f32.xlu0 %v481
      %v483 = vpop.xlane.xlu0 %482
      %vm484 = vcmask 7168
      %485 = vst.msk [vmem:[%s241] sm:$0xff] %vm484, %v483
      %486 = vmatprep.subr.bf16.mxu0 %v471
      %487 = vmatpush1.bf16.xpose.msra.mxu0 %v470
      %488 = vmatprep.subr.bf16.mxu0 0
      %489 = vmatpush1.bf16.xpose.msra.mxu0 0
      %490 = vmatprep.subr.bf16.mxu0 0
      %491 = vmatpush1.bf16.xpose.msra.mxu0 0
      %492 = vmatprep.subr.bf16.mxu0 0
      %493 = vmatpush1.bf16.xpose.msra.mxu0 0
      %494 = vmatprep.subr.bf16.mxu0 0
      %495 = vmatpush1.bf16.xpose.msra.mxu0 0
      %496 = vmatprep.subr.bf16.mxu0 0
      %497 = vmatpush1.bf16.xpose.msra.mxu0 0
      %498 = vmatprep.subr.bf16.mxu0 0
      %499 = vmatpush1.bf16.xpose.msra.mxu0 0
      %500 = vmatprep.subr.bf16.mxu0 0
      %501 = vmatpush1.bf16.xpose.msra.mxu0 0
      %502 = vmatprep.subr.bf16.mxu0 0
      %503 = vmatpush1.bf16.xpose.msra.mxu0 0
      %504 = vmatprep.subr.bf16.mxu0 0
      %505 = vmatpush1.bf16.xpose.msra.mxu0 0
      %506 = vmatprep.subr.bf16.mxu0 0
      %507 = vmatpush1.bf16.xpose.msra.mxu0 0
      %508 = vmatprep.subr.bf16.mxu0 0
      %509 = vmatpush1.bf16.xpose.msra.mxu0 0
      %510 = vmatprep.subr.bf16.mxu0 0
      %511 = vmatpush1.bf16.xpose.msra.mxu0 0
      %512 = vmatprep.subr.bf16.mxu0 0
      %513 = vmatpush1.bf16.xpose.msra.mxu0 0
      %514 = vmatprep.subr.bf16.mxu0 0
      %515 = vmatpush1.bf16.xpose.msra.mxu0 0
      %516 = vmatprep.subr.bf16.mxu0 0
      %517 = vmatpush1.bf16.xpose.msra.mxu0 0
      %518 = vmatprep.mubr.bf16.mxu0 %v471
      %519 = vmatmul.mubr.bf16.gmra.mrb[0].mxu0 %v470
      %v520 = vpop.f32.mrb[0].mxu0
      %v521 = vadd.f32 0.0, %v520
      %v522 = vpop.f32.mrb[0].mxu0
      %v523 = vpop.f32.mrb[0].mxu0
      %v524 = vpop.f32.mrb[0].mxu0
      %525 = vdwg.mxu0
      %526 = vst.msk [vmem:[%s245] sm:$0xff] %vm390, %v521
      %p527 = scmp.lt.s32.totalorder %s17, 1
      %s528 = scalar_select %p527, %s17, 1
      %s529 = smul.addr %s528, 2
      %s530 = smul.addr %s529, 4
      %s531 = scalar_lea.vmem %s3, %s530
      %p532 = scmp.lt.s32.totalorder %s17, 1
      %s533 = scalar_select %p532, %s17, 1
      %s534 = smul.addr %s533, 8
      %s535 = scalar_lea.vmem %s4, %s534
      %p536 = scmp.lt.s32.totalorder %s17, 1
      %s537 = scalar_select %p536, %s17, 1
      %s538 = smul.addr %s537, 8
      %s539 = scalar_lea.vmem %s5, %s538
      // Predicated region
      $region33: #{cma_forward.2} parent=31 // pred_check
        %p540 = pneg %p103
      $region34: #{cma_forward.2} parent=31 // pred_check_branch
        %542 = sbr.rel (%p540) target = $region36
      $region35: #{cma_forward.2} parent=31 // pred_region
        _
      $region36: #{cma_forward.2} parent=31 // pred_fallthru
        _
      // Predicated region
      $region37: #{cma_forward.2} parent=31 // pred_check
        %p543 = pneg %p129
      $region38: #{cma_forward.2} parent=31 // pred_check_branch
        %545 = sbr.rel (%p543) target = $region40
      $region39: #{cma_forward.2} parent=31 // pred_region
        _
      $region40: #{cma_forward.2} parent=31 // pred_fallthru
        _
      // Predicated region
      $region41: #{cma_forward.2} parent=31 // pred_check
        %p546 = pneg %p155
      $region42: #{cma_forward.2} parent=31 // pred_check_branch
        %548 = sbr.rel (%p546) target = $region44
      $region43: #{cma_forward.2} parent=31 // pred_region
        _
      $region44: #{cma_forward.2} parent=31 // pred_fallthru
        _
    $region32: #{cma_forward.2} parent=5 // pred_fallthru
      _
    %p549 = scmp.le.s32.totalorder 2, %s12
    // Predicated region
    $region45: #{cma_forward.2} parent=5 // pred_check
      %p550 = pneg %p549
    $region46: #{cma_forward.2} parent=5 // pred_check_branch
      %552 = sbr.rel (%p550) target = $region48
    $region47: #{cma_forward.2} parent=5 // pred_region
      %s553 = ssub.s32 %s12, 2
      // Predicated region
      $region49: #{cma_forward.2} parent=47 // pred_check
        %p554 = pneg %p109
      $region50: #{cma_forward.2} parent=47 // pred_check_branch
        %556 = sbr.rel (%p554) target = $region52
      $region51: #{cma_forward.2} parent=47 // pred_region
        %p557 = scmp.lt.s32.totalorder %s18, 1
        %s558 = scalar_select %p557, %s18, 1
        %s559 = smul.addr %s558, 2
        %s560 = smul.addr %s559, 4
        %s561 = scalar_lea.vmem %s3, %s560
      $region52: #{cma_forward.2} parent=47 // pred_fallthru
        _
      // Predicated region
      $region53: #{cma_forward.2} parent=47 // pred_check
        %p562 = pneg %p135
      $region54: #{cma_forward.2} parent=47 // pred_check_branch
        %564 = sbr.rel (%p562) target = $region56
      $region55: #{cma_forward.2} parent=47 // pred_region
        %p565 = scmp.lt.s32.totalorder %s18, 1
        %s566 = scalar_select %p565, %s18, 1
        %s567 = smul.addr %s566, 8
        %s568 = scalar_lea.vmem %s4, %s567
      $region56: #{cma_forward.2} parent=47 // pred_fallthru
        _
      // Predicated region
      $region57: #{cma_forward.2} parent=47 // pred_check
        %p569 = pneg %p161
      $region58: #{cma_forward.2} parent=47 // pred_check_branch
        %571 = sbr.rel (%p569) target = $region60
      $region59: #{cma_forward.2} parent=47 // pred_region
        %p572 = scmp.lt.s32.totalorder %s18, 1
        %s573 = scalar_select %p572, %s18, 1
        %s574 = smul.addr %s573, 8
        %s575 = scalar_lea.vmem %s5, %s574
      $region60: #{cma_forward.2} parent=47 // pred_fallthru
        _
    $region48: #{cma_forward.2} parent=5 // pred_fallthru
      _
  $region6: #{cma_forward.2} parent=0 // loop_footer
    %s16 = sadd.s32 1, %s12
  $region7: #{cma_forward.2} parent=0 // loop_footer_branch
    %11 = sbr.rel target = $region3
  $region8: #{cma_forward.2} parent=0 // loop_exit
    _

</llo_original>
